<compile_context>
chip_gen: v7x
topology: tpu7x:2x2x1
jax: 0.10.0
libtpu: 0.0.40
codegen_flags: <defaults>
</compile_context>

<pallas_src>
import jax
import jax.numpy as jnp
from jax.experimental import pallas as pl
from jax.experimental.pallas import tpu as pltpu


# ----------------------------------------------------------------------------
# Pallas kernel: the bertResModel fusion head.
#   vis  = relu(vis_feat @ Wv + bv)            # visual_linear  (1024->128)
#   txt  = relu(txt_feat @ Wt + bt)            # textual_linear (768 ->128)
#   t    = [vis | txt] @ Wtail                 # ONE [256,16] tail matmul
#          cols 0:3 = iw(x3), 3:6 = vis@Wr, 6:9 = tw(x3), 9:12 = txt@Wr
#   out  = (t[:,0:3]+biw)*t[:,3:6] + (t[:,6:9]+btw)*t[:,9:12] + br
# which equals  (iw*vis + tw*txt) @ Wr + br  of the original module.
# ----------------------------------------------------------------------------
def fusion_head_kernel(txt_ref, vis_ref, wt_ref, wv_ref, wtail_ref, bias_ref,
                       out_ref):
    b = bias_ref[...]                       # [3,128] f32, single packed tile
    bt = b[0:1, :]                          # textual_linear bias        [1,128]
    bv = b[1:2, :]                          # visual_linear bias         [1,128]
    biw3 = b[2:3, 0:3]                      # image_weight bias (x3)     [1,3]
    btw3 = b[2:3, 3:6]                      # text_weight bias (x3)      [1,3]
    br3 = b[2:3, 6:9]                       # result bias                [1,3]

    # Hidden projections: bf16 operands, f32 accumulation, f32 elementwise.
    vis = jnp.dot(vis_ref[...], wv_ref[...],
                  preferred_element_type=jnp.float32) + bv
    vis = jnp.maximum(vis, 0.0)                                    # ReLU
    txt = jnp.dot(txt_ref[...], wt_ref[...],
                  preferred_element_type=jnp.float32) + bt
    txt = jnp.maximum(txt, 0.0)                                    # ReLU

    # Single fused tail matmul: [tb,256] @ [256,16].
    # (concat offset 128 is lane-tile aligned; bf16 recast of the ReLU outputs
    #  is intentional precision loss vs. the f32 module — see header.)
    cat = jnp.concatenate([vis, txt], axis=-1).astype(jnp.bfloat16)   # [tb,256]
    t = jnp.dot(cat, wtail_ref[...],
                preferred_element_type=jnp.float32)                   # [tb,16]

    out3 = ((t[:, 0:3] + biw3) * t[:, 3:6]
            + (t[:, 6:9] + btw3) * t[:, 9:12] + br3)                  # [tb,3]

    # Lane-dense epilogue: build the full 128-wide slab in vregs and store it
    # unmasked (no vst.msk); wrapper slices [:, :3].  Construction uses only
    # lane-broadcasts + selects (VPU/XLU work hidden under the feature DMA).
    tb = out3.shape[0]
    lane = jax.lax.broadcasted_iota(jnp.int32, (tb, 128), 1)
    out_ref[...] = jnp.where(
        lane == 0, out3[:, 0:1],
        jnp.where(lane == 1, out3[:, 1:2],
                  jnp.where(lane == 2, out3[:, 2:3], 0.0)))


# ----------------------------------------------------------------------------
# One-time packing of fusion-head parameters into kernel-ready arrays.
# ----------------------------------------------------------------------------
def pack_fusion_params(p):
    # Visual weight: pad K 1000 -> 1024 with zero rows (result unchanged).
    wv_pad = jnp.zeros((1024, 128), jnp.float32).at[:1000].set(p["wv"])

    # Block-structured fused tail weight [256, 16]:
    #   rows 0:128  (vis): cols 0:3 = wiw x3 | 3:6 = wr  | 6:16 = 0
    #   rows 128:256(txt): cols 0:6 = 0      | 6:9 = wtw x3 | 9:12 = wr | 12:16 = 0
    z3 = jnp.zeros((128, 3), jnp.float32)
    z4 = jnp.zeros((128, 4), jnp.float32)
    top = jnp.concatenate([jnp.tile(p["wiw"], (1, 3)), p["wr"], z3, z3, z4],
                          axis=1)
    bot = jnp.concatenate([z3, z3, jnp.tile(p["wtw"], (1, 3)), p["wr"], z4],
                          axis=1)
    wtail = jnp.concatenate([top, bot], axis=0)                    # [256, 16]

    # All five biases packed into one [3,128] f32 tile (one DMA).
    row2 = jnp.zeros((1, 128), jnp.float32)
    row2 = row2.at[0, 0:3].set(p["biw"][0, 0])
    row2 = row2.at[0, 3:6].set(p["btw"][0, 0])
    row2 = row2.at[0, 6:9].set(p["br"][0])
    bias_pack = jnp.concatenate([p["bt"], p["bv"], row2], axis=0)

    return {
        "wt": p["wt"].astype(jnp.bfloat16),        # [768, 128]
        "wv": wv_pad.astype(jnp.bfloat16),         # [1024, 128]
        "wtail": wtail.astype(jnp.bfloat16),       # [256, 16]
        "bias": bias_pack,                         # [3, 128] f32
    }


# ----------------------------------------------------------------------------
# Tiling: batch tile sized from VMEM arithmetic (not a hardcoded 128).
# ----------------------------------------------------------------------------
def _choose_tiling(batch):
    b16 = max(16, -(-batch // 16) * 16)          # 16-row aligned (bf16 packing)

    # Per-row VMEM bytes: double-buffered bf16 feature blocks, double-buffered
    # 128-wide f32 output slab, plus f32 hiddens / bf16 concat / f32 out value.
    per_row = ((768 + 1024) * 2) * 2
    per_row += 128 * 4 * 2
    per_row += (128 + 128 + 128) * 4 + 256 * 2
    # Resident weights (counted twice in case single-buffering is unavailable).
    weights = (768 * 128 + 1024 * 128 + 256 * 16) * 2 + 3 * 128 * 4
    # Stay comfortably under v5e's 16 MiB scoped-VMEM default (no limit bump
    # needed); v6e/v7x defaults (32 MiB) have even more headroom.
    budget = 12 << 20
    max_tile = (budget - 2 * weights) // per_row
    max_tile = min(1024, max(128, (max_tile // 16) * 16))

    # v7x megacore: the "parallel" grid axis only shards across the 2 TCs if
    # there are >=2 grid steps, so force >=2 whenever the batch allows.
    n_steps = max(-(-b16 // max_tile), 2 if b16 >= 32 else 1)
    rows_per_step = -(-b16 // n_steps)
    tile_b = -(-rows_per_step // 16) * 16
    return tile_b, tile_b * n_steps


# ----------------------------------------------------------------------------
# Wrapper: bf16 features in, batch padded only at the remainder, weights
# VMEM-resident (constant index maps, single-buffered when supported).
# ----------------------------------------------------------------------------
def fusion_head(txt_feat, vis_feat, packed):
    B = txt_feat.shape[0]
    assert txt_feat.shape[1] == 768 and vis_feat.shape[1] == 1024
    tile_b, b_pad = _choose_tiling(B)

    txt = txt_feat.astype(jnp.bfloat16)
    vis = vis_feat.astype(jnp.bfloat16)
    if b_pad != B:
        # Only the batch remainder is padded (zero rows -> harmless garbage
        # outputs that are sliced away).  No copy at all when B == b_pad.
        txt = jnp.pad(txt, ((0, b_pad - B), (0, 0)))
        vis = jnp.pad(vis, ((0, b_pad - B), (0, 0)))

    def run(single_buffer_weights):
        wkw = ({"pipeline_mode": pl.Buffered(1)}
               if single_buffer_weights else {})
        grid_spec = pltpu.PrefetchScalarGridSpec(
            num_scalar_prefetch=0,
            grid=(b_pad // tile_b,),
            in_specs=[
                pl.BlockSpec((tile_b, 768), lambda i: (i, 0)),    # txt feats
                pl.BlockSpec((tile_b, 1024), lambda i: (i, 0)),   # vis feats
                pl.BlockSpec((768, 128), lambda i: (0, 0), **wkw),   # Wt
                pl.BlockSpec((1024, 128), lambda i: (0, 0), **wkw),  # Wv
                pl.BlockSpec((256, 16), lambda i: (0, 0), **wkw),    # Wtail
                pl.BlockSpec((3, 128), lambda i: (0, 0), **wkw),     # biases
            ],
            out_specs=pl.BlockSpec((tile_b, 128), lambda i: (i, 0)),
        )
        return pl.pallas_call(
            fusion_head_kernel,
            out_shape=jax.ShapeDtypeStruct((b_pad, 128), jnp.float32),
            grid_spec=grid_spec,
            compiler_params=pltpu.CompilerParams(
                dimension_semantics=("parallel",)),
        )(txt, vis, packed["wt"], packed["wv"], packed["wtail"],
          packed["bias"])

    try:
        out = run(True)          # single-buffered resident weights (~0.5 MB saved)
    except Exception:
        out = run(False)         # fallback: default double-buffered weights
    return out[:B, :3]


# ----------------------------------------------------------------------------
# Deterministic parameter construction (shapes from bertResModel.__init__).
# Linear weights are stored pre-transposed to [in, out]; biases as [1, out].
# ----------------------------------------------------------------------------
def make_params(key):
    ks = jax.random.split(key, 12)

    def lin(kw, kb, n_in, n_out):
        scale = 1.0 / jnp.sqrt(jnp.float32(n_in))
        w = jax.random.uniform(kw, (n_in, n_out), jnp.float32, -scale, scale)
        b = jax.random.uniform(kb, (1, n_out), jnp.float32, -scale, scale)
        return w, b

    p = {}
    p["wt"], p["bt"] = lin(ks[0], ks[1], 768, 128)     # textual_linear
    p["wv"], p["bv"] = lin(ks[2], ks[3], 1000, 128)    # visual_linear
    p["wiw"], p["biw"] = lin(ks[4], ks[5], 128, 1)     # image_weight
    p["wtw"], p["btw"] = lin(ks[6], ks[7], 128, 1)     # text_weight
    p["wr"], p["br"] = lin(ks[8], ks[9], 128, 3)       # result

    # Stand-in backbone parameters.
    p["embed"] = jax.random.normal(ks[10], (100, 768), jnp.float32) * 0.02
    wres = jax.random.normal(ks[11], (3, 1000), jnp.float32) * 0.02
    p["wres"] = wres
    # K pre-padded to 1024 so the visual feature is emitted kernel-ready.
    p["wres_pad"] = jnp.zeros((3, 1024), jnp.float32).at[:, :1000].set(wres)
    return p


# ----------------------------------------------------------------------------
# Stand-in backbones (plain-JAX glue producing backbone-shaped features).
# Features are emitted directly in bf16 (the kernel streaming dtype) so the
# wrapper does not re-materialize padded/cast copies.
# ----------------------------------------------------------------------------
def text_backbone(input_ids, attention_mask, params):
    # TODO(synk): stand-in for BertModel (CLS features); masked-mean embeddings.
    emb = params["embed"][input_ids]                       # [B, S, 768]
    mask = attention_mask.astype(jnp.float32)[..., None]   # [B, S, 1]
    feat = (emb * mask).sum(axis=1) / jnp.maximum(mask.sum(axis=1), 1.0)
    return feat.astype(jnp.bfloat16)                       # [B, 768] bf16


def image_backbone(image, params):
    # TODO(synk): stand-in for resnet34; global-avg-pool NCHW -> linear.
    pooled = image.mean(axis=(2, 3))                       # [B, 3]
    return (pooled @ params["wres_pad"]).astype(jnp.bfloat16)   # [B, 1024] bf16


def bert_res_model_forward(input_ids, attention_mask, image, params, packed):
    txt_feat = text_backbone(input_ids, attention_mask, params)   # [B, 768]
    vis_feat = image_backbone(image, params)                      # [B, 1024]
    return fusion_head(txt_feat, vis_feat, packed)                # [B, 3]


# ----------------------------------------------------------------------------
# Pure-JAX references for validation.
# ----------------------------------------------------------------------------
def fusion_head_ref_f32(txt_feat, vis_feat_1000, p):
    # Original nn.Module semantics in f32.
    vis = jnp.maximum(vis_feat_1000 @ p["wv"] + p["bv"], 0.0)
    iw = vis @ p["wiw"] + p["biw"]
    txt = jnp.maximum(txt_feat @ p["wt"] + p["bt"], 0.0)
    tw = txt @ p["wtw"] + p["btw"]
    fused = iw * vis + tw * txt
    return fused @ p["wr"] + p["br"]


def fusion_head_ref_packed(txt_bf16, vis_bf16, packed, p):
    # Same math as the kernel (bf16 operands, f32 accumulation, fused tail).
    v = jnp.maximum(jnp.dot(vis_bf16, packed["wv"],
                            preferred_element_type=jnp.float32) + p["bv"], 0.0)
    t = jnp.maximum(jnp.dot(txt_bf16, packed["wt"],
                            preferred_element_type=jnp.float32) + p["bt"], 0.0)
    cat = jnp.concatenate([v, t], axis=-1).astype(jnp.bfloat16)
    z = jnp.dot(cat, packed["wtail"], preferred_element_type=jnp.float32)
    return ((z[:, 0:3] + p["biw"]) * z[:, 3:6]
            + (z[:, 6:9] + p["btw"]) * z[:, 9:12] + p["br"])


if __name__ == "__main__":
    key = jax.random.PRNGKey(0)
    k_par, k_ids, k_img = jax.random.split(key, 3)

    B, S, H, W = 2, 8, 16, 16
    params = make_params(k_par)
    packed = pack_fusion_params(params)

    input_ids = jax.random.randint(k_ids, (B, S), 0, 100, dtype=jnp.int32)
    attention_mask = jnp.ones((B, S), dtype=jnp.int32)
    image = jax.random.normal(k_img, (B, 3, H, W), jnp.float32)   # NCHW

    out = bert_res_model_forward(input_ids, attention_mask, image, params,
                                 packed)
    out = jax.block_until_ready(out)
    assert out.shape == (B, 3)

    # Validate the Pallas fusion head.
    txt_feat = text_backbone(input_ids, attention_mask, params)   # bf16 [B,768]
    vis_feat = image_backbone(image, params)                      # bf16 [B,1024]
    # (a) exact same math in plain JAX (bf16 operands, fused tail) -> tight
    ref_bf16 = fusion_head_ref_packed(txt_feat, vis_feat, packed, params)
    assert jnp.allclose(out, ref_bf16, atol=5e-4, rtol=5e-3)
    # (b) original f32 module semantics -> loose (bf16 rounding only)
    ref_f32 = fusion_head_ref_f32(txt_feat.astype(jnp.float32),
                                  vis_feat[:, :1000].astype(jnp.float32),
                                  params)
    assert jnp.allclose(out, ref_f32, atol=1e-2, rtol=1e-2)

    print("KERNEL_OK")
</pallas_src>

<mosaic_0001>
module attributes {stable_mosaic.version = 11 : i64} {
  func.func @fusion_head_kernel(%arg0: i32, %arg1: memref<16x768xbf16, #tpu.memory_space<vmem>>, %arg2: memref<16x1024xbf16, #tpu.memory_space<vmem>>, %arg3: memref<768x128xbf16, #tpu.memory_space<vmem>>, %arg4: memref<1024x128xbf16, #tpu.memory_space<vmem>>, %arg5: memref<256x16xbf16, #tpu.memory_space<vmem>>, %arg6: memref<3x128xf32, #tpu.memory_space<vmem>>, %arg7: memref<16x128xf32, #tpu.memory_space<vmem>>) attributes {dimension_semantics = [#tpu.dimension_semantics<parallel>], iteration_bounds = array<i64: 1>, scalar_prefetch = 0 : i64, scratch_operands = 0 : i64, tpu.core_type = #tpu.core_type<tc>, window_params = [{transform_indices = @transform_0, window_bounds = array<i64: 16, 768>}, {transform_indices = @transform_1, window_bounds = array<i64: 16, 1024>}, {pipeline_mode = #tpu.pipeline_mode<synchronous>, transform_indices = @transform_2, window_bounds = array<i64: 768, 128>}, {pipeline_mode = #tpu.pipeline_mode<synchronous>, transform_indices = @transform_3, window_bounds = array<i64: 1024, 128>}, {pipeline_mode = #tpu.pipeline_mode<synchronous>, transform_indices = @transform_4, window_bounds = array<i64: 256, 16>}, {pipeline_mode = #tpu.pipeline_mode<synchronous>, transform_indices = @transform_5, window_bounds = array<i64: 3, 128>}, {transform_indices = @transform_6, window_bounds = array<i64: 16, 128>}]} {
    %c0 = arith.constant 0 : index
    %c0_0 = arith.constant 0 : index
    %0 = vector.load %arg6[%c0, %c0_0] : memref<3x128xf32, #tpu.memory_space<vmem>>, vector<3x128xf32>
    %1 = vector.extract_strided_slice %0 {offsets = [0, 0], sizes = [1, 128], strides = [1, 1]} : vector<3x128xf32> to vector<1x128xf32>
    %2 = vector.extract_strided_slice %0 {offsets = [1, 0], sizes = [1, 128], strides = [1, 1]} : vector<3x128xf32> to vector<1x128xf32>
    %3 = vector.extract_strided_slice %0 {offsets = [2, 0], sizes = [1, 3], strides = [1, 1]} : vector<3x128xf32> to vector<1x3xf32>
    %4 = vector.extract_strided_slice %0 {offsets = [2, 3], sizes = [1, 3], strides = [1, 1]} : vector<3x128xf32> to vector<1x3xf32>
    %5 = vector.extract_strided_slice %0 {offsets = [2, 6], sizes = [1, 3], strides = [1, 1]} : vector<3x128xf32> to vector<1x3xf32>
    %c0_1 = arith.constant 0 : index
    %c0_2 = arith.constant 0 : index
    %6 = vector.load %arg2[%c0_1, %c0_2] : memref<16x1024xbf16, #tpu.memory_space<vmem>>, vector<16x1024xbf16>
    %c0_3 = arith.constant 0 : index
    %c0_4 = arith.constant 0 : index
    %7 = vector.load %arg4[%c0_3, %c0_4] : memref<1024x128xbf16, #tpu.memory_space<vmem>>, vector<1024x128xbf16>
    %cst = arith.constant dense<0.000000e+00> : vector<16x128xf32>
    %8 = tpu.matmul %6, %7, %cst {dimension_numbers = #tpu.dot_dimension_numbers<[1], [0], [0], [1], [0, 0, 1, 1], [], []>} : vector<16x1024xbf16>, vector<1024x128xbf16>, vector<16x128xf32> -> vector<16x128xf32>
    %9 = vector.broadcast %2 : vector<1x128xf32> to vector<16x128xf32>
    %10 = arith.addf %8, %9 : vector<16x128xf32>
    %cst_5 = arith.constant 0.000000e+00 : f32
    %11 = vector.broadcast %cst_5 : f32 to vector<16x128xf32>
    %12 = arith.maximumf %10, %11 : vector<16x128xf32>
    %c0_6 = arith.constant 0 : index
    %c0_7 = arith.constant 0 : index
    %13 = vector.load %arg1[%c0_6, %c0_7] : memref<16x768xbf16, #tpu.memory_space<vmem>>, vector<16x768xbf16>
    %c0_8 = arith.constant 0 : index
    %c0_9 = arith.constant 0 : index
    %14 = vector.load %arg3[%c0_8, %c0_9] : memref<768x128xbf16, #tpu.memory_space<vmem>>, vector<768x128xbf16>
    %cst_10 = arith.constant dense<0.000000e+00> : vector<16x128xf32>
    %15 = tpu.matmul %13, %14, %cst_10 {dimension_numbers = #tpu.dot_dimension_numbers<[1], [0], [0], [1], [0, 0, 1, 1], [], []>} : vector<16x768xbf16>, vector<768x128xbf16>, vector<16x128xf32> -> vector<16x128xf32>
    %16 = vector.broadcast %1 : vector<1x128xf32> to vector<16x128xf32>
    %17 = arith.addf %15, %16 : vector<16x128xf32>
    %cst_11 = arith.constant 0.000000e+00 : f32
    %18 = vector.broadcast %cst_11 : f32 to vector<16x128xf32>
    %19 = arith.maximumf %17, %18 : vector<16x128xf32>
    %20 = tpu.concatenate %12, %19 in 1 : vector<16x128xf32>, vector<16x128xf32> -> vector<16x256xf32>
    %21 = arith.truncf %20 : vector<16x256xf32> to vector<16x256xbf16>
    %c0_12 = arith.constant 0 : index
    %c0_13 = arith.constant 0 : index
    %22 = vector.load %arg5[%c0_12, %c0_13] : memref<256x16xbf16, #tpu.memory_space<vmem>>, vector<256x16xbf16>
    %cst_14 = arith.constant dense<0.000000e+00> : vector<16x16xf32>
    %23 = tpu.matmul %21, %22, %cst_14 {dimension_numbers = #tpu.dot_dimension_numbers<[1], [0], [0], [1], [0, 0, 1, 1], [], []>} : vector<16x256xbf16>, vector<256x16xbf16>, vector<16x16xf32> -> vector<16x16xf32>
    %24 = vector.extract_strided_slice %23 {offsets = [0, 0], sizes = [16, 3], strides = [1, 1]} : vector<16x16xf32> to vector<16x3xf32>
    %25 = vector.broadcast %3 : vector<1x3xf32> to vector<16x3xf32>
    %26 = arith.addf %24, %25 : vector<16x3xf32>
    %27 = vector.extract_strided_slice %23 {offsets = [0, 3], sizes = [16, 3], strides = [1, 1]} : vector<16x16xf32> to vector<16x3xf32>
    %28 = arith.mulf %26, %27 : vector<16x3xf32>
    %29 = vector.extract_strided_slice %23 {offsets = [0, 6], sizes = [16, 3], strides = [1, 1]} : vector<16x16xf32> to vector<16x3xf32>
    %30 = vector.broadcast %4 : vector<1x3xf32> to vector<16x3xf32>
    %31 = arith.addf %29, %30 : vector<16x3xf32>
    %32 = vector.extract_strided_slice %23 {offsets = [0, 9], sizes = [16, 3], strides = [1, 1]} : vector<16x16xf32> to vector<16x3xf32>
    %33 = arith.mulf %31, %32 : vector<16x3xf32>
    %34 = arith.addf %28, %33 : vector<16x3xf32>
    %35 = vector.broadcast %5 : vector<1x3xf32> to vector<16x3xf32>
    %36 = arith.addf %34, %35 : vector<16x3xf32>
    %37 = tpu.iota {dimensions = array<i32: 1>} : vector<16x128xi32>
    %c0_i32 = arith.constant 0 : i32
    %38 = vector.broadcast %c0_i32 : i32 to vector<16x128xi32>
    %39 = arith.cmpi eq, %37, %38 : vector<16x128xi32>
    %40 = vector.extract_strided_slice %36 {offsets = [0, 0], sizes = [16, 1], strides = [1, 1]} : vector<16x3xf32> to vector<16x1xf32>
    %c1_i32 = arith.constant 1 : i32
    %41 = vector.broadcast %c1_i32 : i32 to vector<16x128xi32>
    %42 = arith.cmpi eq, %37, %41 : vector<16x128xi32>
    %43 = vector.extract_strided_slice %36 {offsets = [0, 1], sizes = [16, 1], strides = [1, 1]} : vector<16x3xf32> to vector<16x1xf32>
    %c2_i32 = arith.constant 2 : i32
    %44 = vector.broadcast %c2_i32 : i32 to vector<16x128xi32>
    %45 = arith.cmpi eq, %37, %44 : vector<16x128xi32>
    %46 = vector.extract_strided_slice %36 {offsets = [0, 2], sizes = [16, 1], strides = [1, 1]} : vector<16x3xf32> to vector<16x1xf32>
    %cst_15 = arith.constant 0.000000e+00 : f32
    %47 = vector.shape_cast %46 : vector<16x1xf32> to vector<16x1xf32>
    %48 = vector.broadcast %47 : vector<16x1xf32> to vector<16x128xf32>
    %49 = vector.broadcast %cst_15 : f32 to vector<16x128xf32>
    %50 = arith.select %45, %48, %49 : vector<16x128xi1>, vector<16x128xf32>
    %51 = vector.shape_cast %43 : vector<16x1xf32> to vector<16x1xf32>
    %52 = vector.broadcast %51 : vector<16x1xf32> to vector<16x128xf32>
    %53 = arith.select %42, %52, %50 : vector<16x128xi1>, vector<16x128xf32>
    %54 = vector.shape_cast %40 : vector<16x1xf32> to vector<16x1xf32>
    %55 = vector.broadcast %54 : vector<16x1xf32> to vector<16x128xf32>
    %56 = arith.select %39, %55, %53 : vector<16x128xi1>, vector<16x128xf32>
    %c0_16 = arith.constant 0 : index
    %c0_17 = arith.constant 0 : index
    %57 = vector.load %arg7[%c0_16, %c0_17] : memref<16x128xf32, #tpu.memory_space<vmem>>, vector<16x128xf32>
    tpu.vector_store %arg7[%c0_16, %c0_17], %56 {strides = array<i32>} : memref<16x128xf32, #tpu.memory_space<vmem>>, vector<16x128xf32>,
    return
  }
  func.func @transform_0(%arg0: i32) -> (i32, i32) {
    %c0_i32 = arith.constant 0 : i32
    %c0_i32_0 = arith.constant 0 : i32
    return %arg0, %c0_i32 : i32, i32
  }
  func.func @transform_1(%arg0: i32) -> (i32, i32) {
    %c0_i32 = arith.constant 0 : i32
    %c0_i32_0 = arith.constant 0 : i32
    return %arg0, %c0_i32 : i32, i32
  }
  func.func @transform_2(%arg0: i32) -> (i32, i32) {
    %c0_i32 = arith.constant 0 : i32
    %c0_i32_0 = arith.constant 0 : i32
    %c0_i32_1 = arith.constant 0 : i32
    return %c0_i32, %c0_i32_0 : i32, i32
  }
  func.func @transform_3(%arg0: i32) -> (i32, i32) {
    %c0_i32 = arith.constant 0 : i32
    %c0_i32_0 = arith.constant 0 : i32
    %c0_i32_1 = arith.constant 0 : i32
    return %c0_i32, %c0_i32_0 : i32, i32
  }
  func.func @transform_4(%arg0: i32) -> (i32, i32) {
    %c0_i32 = arith.constant 0 : i32
    %c0_i32_0 = arith.constant 0 : i32
    %c0_i32_1 = arith.constant 0 : i32
    return %c0_i32, %c0_i32_0 : i32, i32
  }
  func.func @transform_5(%arg0: i32) -> (i32, i32) {
    %c0_i32 = arith.constant 0 : i32
    %c0_i32_0 = arith.constant 0 : i32
    %c0_i32_1 = arith.constant 0 : i32
    return %c0_i32, %c0_i32_0 : i32, i32
  }
  func.func @transform_6(%arg0: i32) -> (i32, i32) {
    %c0_i32 = arith.constant 0 : i32
    %c0_i32_0 = arith.constant 0 : i32
    return %arg0, %c0_i32 : i32, i32
  }
}

module attributes {stable_mosaic.version = 11 : i64} {
  func.func @fusion_head_kernel(%arg0: i32, %arg1: memref<16x768xbf16, #tpu.memory_space<vmem>>, %arg2: memref<16x1024xbf16, #tpu.memory_space<vmem>>, %arg3: memref<768x128xbf16, #tpu.memory_space<vmem>>, %arg4: memref<1024x128xbf16, #tpu.memory_space<vmem>>, %arg5: memref<256x16xbf16, #tpu.memory_space<vmem>>, %arg6: memref<3x128xf32, #tpu.memory_space<vmem>>, %arg7: memref<16x128xf32, #tpu.memory_space<vmem>>) attributes {dimension_semantics = [#tpu.dimension_semantics<parallel>], iteration_bounds = array<i64: 1>, scalar_prefetch = 0 : i64, scratch_operands = 0 : i64, tpu.core_type = #tpu.core_type<tc>, window_params = [{transform_indices = @transform_0, window_bounds = array<i64: 16, 768>}, {transform_indices = @transform_1, window_bounds = array<i64: 16, 1024>}, {pipeline_mode = #tpu.pipeline_mode<synchronous>, transform_indices = @transform_2, window_bounds = array<i64: 768, 128>}, {pipeline_mode = #tpu.pipeline_mode<synchronous>, transform_indices = @transform_3, window_bounds = array<i64: 1024, 128>}, {pipeline_mode = #tpu.pipeline_mode<synchronous>, transform_indices = @transform_4, window_bounds = array<i64: 256, 16>}, {pipeline_mode = #tpu.pipeline_mode<synchronous>, transform_indices = @transform_5, window_bounds = array<i64: 3, 128>}, {transform_indices = @transform_6, window_bounds = array<i64: 16, 128>}]} {
    %c0 = arith.constant 0 : index
    %c0_0 = arith.constant 0 : index
    %0 = vector.load %arg6[%c0, %c0_0] : memref<3x128xf32, #tpu.memory_space<vmem>>, vector<3x128xf32>
    %1 = vector.extract_strided_slice %0 {offsets = [0, 0], sizes = [1, 128], strides = [1, 1]} : vector<3x128xf32> to vector<1x128xf32>
    %2 = vector.extract_strided_slice %0 {offsets = [1, 0], sizes = [1, 128], strides = [1, 1]} : vector<3x128xf32> to vector<1x128xf32>
    %3 = vector.extract_strided_slice %0 {offsets = [2, 0], sizes = [1, 3], strides = [1, 1]} : vector<3x128xf32> to vector<1x3xf32>
    %4 = vector.extract_strided_slice %0 {offsets = [2, 3], sizes = [1, 3], strides = [1, 1]} : vector<3x128xf32> to vector<1x3xf32>
    %5 = vector.extract_strided_slice %0 {offsets = [2, 6], sizes = [1, 3], strides = [1, 1]} : vector<3x128xf32> to vector<1x3xf32>
    %c0_1 = arith.constant 0 : index
    %c0_2 = arith.constant 0 : index
    %6 = vector.load %arg2[%c0_1, %c0_2] : memref<16x1024xbf16, #tpu.memory_space<vmem>>, vector<16x1024xbf16>
    %c0_3 = arith.constant 0 : index
    %c0_4 = arith.constant 0 : index
    %7 = vector.load %arg4[%c0_3, %c0_4] : memref<1024x128xbf16, #tpu.memory_space<vmem>>, vector<1024x128xbf16>
    %cst = arith.constant dense<0.000000e+00> : vector<16x128xf32>
    %8 = tpu.matmul %6, %7, %cst {dimension_numbers = #tpu.dot_dimension_numbers<[1], [0], [0], [1], [0, 0, 1, 1], [], []>} : vector<16x1024xbf16>, vector<1024x128xbf16>, vector<16x128xf32> -> vector<16x128xf32>
    %9 = vector.broadcast %2 : vector<1x128xf32> to vector<16x128xf32>
    %10 = arith.addf %8, %9 : vector<16x128xf32>
    %cst_5 = arith.constant 0.000000e+00 : f32
    %11 = vector.broadcast %cst_5 : f32 to vector<16x128xf32>
    %12 = arith.maximumf %10, %11 : vector<16x128xf32>
    %c0_6 = arith.constant 0 : index
    %c0_7 = arith.constant 0 : index
    %13 = vector.load %arg1[%c0_6, %c0_7] : memref<16x768xbf16, #tpu.memory_space<vmem>>, vector<16x768xbf16>
    %c0_8 = arith.constant 0 : index
    %c0_9 = arith.constant 0 : index
    %14 = vector.load %arg3[%c0_8, %c0_9] : memref<768x128xbf16, #tpu.memory_space<vmem>>, vector<768x128xbf16>
    %cst_10 = arith.constant dense<0.000000e+00> : vector<16x128xf32>
    %15 = tpu.matmul %13, %14, %cst_10 {dimension_numbers = #tpu.dot_dimension_numbers<[1], [0], [0], [1], [0, 0, 1, 1], [], []>} : vector<16x768xbf16>, vector<768x128xbf16>, vector<16x128xf32> -> vector<16x128xf32>
    %16 = vector.broadcast %1 : vector<1x128xf32> to vector<16x128xf32>
    %17 = arith.addf %15, %16 : vector<16x128xf32>
    %cst_11 = arith.constant 0.000000e+00 : f32
    %18 = vector.broadcast %cst_11 : f32 to vector<16x128xf32>
    %19 = arith.maximumf %17, %18 : vector<16x128xf32>
    %20 = tpu.concatenate %12, %19 in 1 : vector<16x128xf32>, vector<16x128xf32> -> vector<16x256xf32>
    %21 = arith.truncf %20 : vector<16x256xf32> to vector<16x256xbf16>
    %c0_12 = arith.constant 0 : index
    %c0_13 = arith.constant 0 : index
    %22 = vector.load %arg5[%c0_12, %c0_13] : memref<256x16xbf16, #tpu.memory_space<vmem>>, vector<256x16xbf16>
    %cst_14 = arith.constant dense<0.000000e+00> : vector<16x16xf32>
    %23 = tpu.matmul %21, %22, %cst_14 {dimension_numbers = #tpu.dot_dimension_numbers<[1], [0], [0], [1], [0, 0, 1, 1], [], []>} : vector<16x256xbf16>, vector<256x16xbf16>, vector<16x16xf32> -> vector<16x16xf32>
    %24 = vector.extract_strided_slice %23 {offsets = [0, 0], sizes = [16, 3], strides = [1, 1]} : vector<16x16xf32> to vector<16x3xf32>
    %25 = vector.broadcast %3 : vector<1x3xf32> to vector<16x3xf32>
    %26 = arith.addf %24, %25 : vector<16x3xf32>
    %27 = vector.extract_strided_slice %23 {offsets = [0, 3], sizes = [16, 3], strides = [1, 1]} : vector<16x16xf32> to vector<16x3xf32>
    %28 = arith.mulf %26, %27 : vector<16x3xf32>
    %29 = vector.extract_strided_slice %23 {offsets = [0, 6], sizes = [16, 3], strides = [1, 1]} : vector<16x16xf32> to vector<16x3xf32>
    %30 = vector.broadcast %4 : vector<1x3xf32> to vector<16x3xf32>
    %31 = arith.addf %29, %30 : vector<16x3xf32>
    %32 = vector.extract_strided_slice %23 {offsets = [0, 9], sizes = [16, 3], strides = [1, 1]} : vector<16x16xf32> to vector<16x3xf32>
    %33 = arith.mulf %31, %32 : vector<16x3xf32>
    %34 = arith.addf %28, %33 : vector<16x3xf32>
    %35 = vector.broadcast %5 : vector<1x3xf32> to vector<16x3xf32>
    %36 = arith.addf %34, %35 : vector<16x3xf32>
    %37 = tpu.iota {dimensions = array<i32: 1>} : vector<16x128xi32>
    %c0_i32 = arith.constant 0 : i32
    %38 = vector.broadcast %c0_i32 : i32 to vector<16x128xi32>
    %39 = arith.cmpi eq, %37, %38 : vector<16x128xi32>
    %40 = vector.extract_strided_slice %36 {offsets = [0, 0], sizes = [16, 1], strides = [1, 1]} : vector<16x3xf32> to vector<16x1xf32>
    %c1_i32 = arith.constant 1 : i32
    %41 = vector.broadcast %c1_i32 : i32 to vector<16x128xi32>
    %42 = arith.cmpi eq, %37, %41 : vector<16x128xi32>
    %43 = vector.extract_strided_slice %36 {offsets = [0, 1], sizes = [16, 1], strides = [1, 1]} : vector<16x3xf32> to vector<16x1xf32>
    %c2_i32 = arith.constant 2 : i32
    %44 = vector.broadcast %c2_i32 : i32 to vector<16x128xi32>
    %45 = arith.cmpi eq, %37, %44 : vector<16x128xi32>
    %46 = vector.extract_strided_slice %36 {offsets = [0, 2], sizes = [16, 1], strides = [1, 1]} : vector<16x3xf32> to vector<16x1xf32>
    %cst_15 = arith.constant 0.000000e+00 : f32
    %47 = vector.shape_cast %46 : vector<16x1xf32> to vector<16x1xf32>
    %48 = vector.broadcast %47 : vector<16x1xf32> to vector<16x128xf32>
    %49 = vector.broadcast %cst_15 : f32 to vector<16x128xf32>
    %50 = arith.select %45, %48, %49 : vector<16x128xi1>, vector<16x128xf32>
    %51 = vector.shape_cast %43 : vector<16x1xf32> to vector<16x1xf32>
    %52 = vector.broadcast %51 : vector<16x1xf32> to vector<16x128xf32>
    %53 = arith.select %42, %52, %50 : vector<16x128xi1>, vector<16x128xf32>
    %54 = vector.shape_cast %40 : vector<16x1xf32> to vector<16x1xf32>
    %55 = vector.broadcast %54 : vector<16x1xf32> to vector<16x128xf32>
    %56 = arith.select %39, %55, %53 : vector<16x128xi1>, vector<16x128xf32>
    %c0_16 = arith.constant 0 : index
    %c0_17 = arith.constant 0 : index
    %57 = vector.load %arg7[%c0_16, %c0_17] : memref<16x128xf32, #tpu.memory_space<vmem>>, vector<16x128xf32>
    tpu.vector_store %arg7[%c0_16, %c0_17], %56 {strides = array<i32>} : memref<16x128xf32, #tpu.memory_space<vmem>>, vector<16x128xf32>,
    return
  }
  func.func @transform_0(%arg0: i32) -> (i32, i32) {
    %c0_i32 = arith.constant 0 : i32
    %c0_i32_0 = arith.constant 0 : i32
    return %arg0, %c0_i32 : i32, i32
  }
  func.func @transform_1(%arg0: i32) -> (i32, i32) {
    %c0_i32 = arith.constant 0 : i32
    %c0_i32_0 = arith.constant 0 : i32
    return %arg0, %c0_i32 : i32, i32
  }
  func.func @transform_2(%arg0: i32) -> (i32, i32) {
    %c0_i32 = arith.constant 0 : i32
    %c0_i32_0 = arith.constant 0 : i32
    %c0_i32_1 = arith.constant 0 : i32
    return %c0_i32, %c0_i32_0 : i32, i32
  }
  func.func @transform_3(%arg0: i32) -> (i32, i32) {
    %c0_i32 = arith.constant 0 : i32
    %c0_i32_0 = arith.constant 0 : i32
    %c0_i32_1 = arith.constant 0 : i32
    return %c0_i32, %c0_i32_0 : i32, i32
  }
  func.func @transform_4(%arg0: i32) -> (i32, i32) {
    %c0_i32 = arith.constant 0 : i32
    %c0_i32_0 = arith.constant 0 : i32
    %c0_i32_1 = arith.constant 0 : i32
    return %c0_i32, %c0_i32_0 : i32, i32
  }
  func.func @transform_5(%arg0: i32) -> (i32, i32) {
    %c0_i32 = arith.constant 0 : i32
    %c0_i32_0 = arith.constant 0 : i32
    %c0_i32_1 = arith.constant 0 : i32
    return %c0_i32, %c0_i32_0 : i32, i32
  }
  func.func @transform_6(%arg0: i32) -> (i32, i32) {
    %c0_i32 = arith.constant 0 : i32
    %c0_i32_0 = arith.constant 0 : i32
    return %arg0, %c0_i32 : i32, i32
  }
}

</mosaic_0001>

<llo_original>
// kernel: tpu_custom_call.1
$region0: #{tpu_custom_call.1}
  #allocation0 [shape = 'u32[]', space=smem, size = 0x4, offset = 0x4, fixed_abs, tag = 'smem constant byte address 0x4 - core index']
  #allocation1 [shape = 'u32[144,128]{1,0:T(1,128)}', space=vmem, size = 0x12000, scoped, tag = 'internal scratch']
  %s0 = inlined_call_operand.vmem [shape: bf16[16,768], index: 0, kind: input, shape index: {}]
  %s1 = inlined_call_operand.vmem [shape: bf16[16,1024], index: 1, kind: input, shape index: {}]
  %s2 = inlined_call_operand.hbm [shape: bf16[768,128], index: 2, kind: input, shape index: {}]
  %s3 = inlined_call_operand.hbm [shape: bf16[1024,128], index: 3, kind: input, shape index: {}]
  %s4 = inlined_call_operand.vmem [shape: bf16[256,16], index: 4, kind: input, shape index: {}]
  %s5 = inlined_call_operand.vmem [shape: f32[3,128], index: 5, kind: input, shape index: {}]
  %s6 = inlined_call_operand.hbm [shape: f32[16,128], index: 6, kind: output, shape index: {}]
  %s7 = sld [smem:[#allocation0]]
  $region42: #{tpu_custom_call.1} parent=0
    _
  %s9 = ssub.s32 1, %s7
  %s10 = scalar_select 0, %s9, %s7
  $region1: #{tpu_custom_call.1} parent=0
    #allocation2 [shape = 'u8[196608]{0}', space=vmem, size = 0x30000, scoped, tag = 'input window, operand 2, single buffered']
    #allocation3 [shape = 's32[1]{0}', space=sflag, size = 0x4, scoped, tag = 'scoped memory for tpu_custom_call.1']
    #allocation4 [shape = 's32[1]{0}', space=sflag, size = 0x4, scoped, tag = 'scoped memory for tpu_custom_call.1']
    #allocation5 [shape = 'u8[262144]{0}', space=vmem, size = 0x40000, scoped, tag = 'input window, operand 3, single buffered']
    #allocation6 [shape = 's32[1]{0}', space=sflag, size = 0x4, scoped, tag = 'scoped memory for tpu_custom_call.1']
    #allocation7 [shape = 'u8[8192]{0}', space=vmem, size = 0x2000, scoped, tag = 'output window, operand 0, single buffered']
    %11 = vsyncpa [#allocation3], 0
    %12 = vsyncpa [#allocation6], 0
    %13 = vsyncpa [#allocation4], 0
    // Predicated region
    $region2: #{tpu_custom_call.1} parent=1 // pred_check
      _
    $region3: #{tpu_custom_call.1} parent=1 // pred_check_branch
      %15 = sbr.rel (0) target = $region5
    $region4: #{tpu_custom_call.1} parent=1 // pred_region
      _
    $region5: #{tpu_custom_call.1} parent=1 // pred_fallthru
      _
    // Predicated region
    $region6: #{tpu_custom_call.1} parent=1 // pred_check
      _
    $region7: #{tpu_custom_call.1} parent=1 // pred_check_branch
      %17 = sbr.rel (0) target = $region9
    $region8: #{tpu_custom_call.1} parent=1 // pred_region
      _
    $region9: #{tpu_custom_call.1} parent=1 // pred_fallthru
      _
    // Predicated region
    $region10: #{tpu_custom_call.1} parent=1 // pred_check
      _
    $region11: #{tpu_custom_call.1} parent=1 // pred_check_branch
      %19 = sbr.rel (0) target = $region13
    $region12: #{tpu_custom_call.1} parent=1 // pred_region
      %s21 = ssub.s32 6144, 6144
      %22 = vsyncadd [#allocation3], %s21
      %s23 = sshll.u32 [#allocation2], 4
      %s24 = int_to_ptr.vmem [resolvable:$true] %s23
      %29 = dma.hbm_to_vmem [thread:$0]  %s2, 6144, %s24, [#allocation3], 64, 64, 4
    $region13: #{tpu_custom_call.1} parent=1 // pred_fallthru
      _
    // Predicated region
    $region14: #{tpu_custom_call.1} parent=1 // pred_check
      _
    $region15: #{tpu_custom_call.1} parent=1 // pred_check_branch
      %31 = sbr.rel (0) target = $region17
    $region16: #{tpu_custom_call.1} parent=1 // pred_region
      %s33 = ssub.s32 8192, 8192
      %34 = vsyncadd [#allocation6], %s33
      %s35 = sshll.u32 [#allocation5], 4
      %s36 = int_to_ptr.vmem [resolvable:$true] %s35
      %41 = dma.hbm_to_vmem [thread:$0]  %s3, 8192, %s36, [#allocation6], 64, 64, 4
    $region17: #{tpu_custom_call.1} parent=1 // pred_fallthru
      _
    // Predicated region
    $region18: #{tpu_custom_call.1} parent=1 // pred_check
      _
    $region19: #{tpu_custom_call.1} parent=1 // pred_check_branch
      %43 = sbr.rel (0) target = $region21
    $region20: #{tpu_custom_call.1} parent=1 // pred_region
      _
    $region21: #{tpu_custom_call.1} parent=1 // pred_fallthru
      _
    // Predicated region
    $region22: #{tpu_custom_call.1} parent=1 // pred_check
      _
    $region23: #{tpu_custom_call.1} parent=1 // pred_check_branch
      %45 = sbr.rel (0) target = $region25
    $region24: #{tpu_custom_call.1} parent=1 // pred_region
      _
    $region25: #{tpu_custom_call.1} parent=1 // pred_fallthru
      _
    // Predicated region
    $region26: #{tpu_custom_call.1} parent=1 // pred_check
      _
    $region27: #{tpu_custom_call.1} parent=1 // pred_check_branch
      %47 = sbr.rel (0) target = $region29
    $region28: #{tpu_custom_call.1} parent=1 // pred_region
      %48 = dma.done [#allocation3], 6144
    $region29: #{tpu_custom_call.1} parent=1 // pred_fallthru
      _
    // Predicated region
    $region30: #{tpu_custom_call.1} parent=1 // pred_check
      _
    $region31: #{tpu_custom_call.1} parent=1 // pred_check_branch
      %50 = sbr.rel (0) target = $region33
    $region32: #{tpu_custom_call.1} parent=1 // pred_region
      %51 = dma.done [#allocation6], 8192
    $region33: #{tpu_custom_call.1} parent=1 // pred_fallthru
      _
    %v53 = vld [vmem:[%s5] sm:$0x7]
    %v54 = vld [vmem:[%s1] sm:$0xff]
    %v55 = vld [vmem:[%s1 + $0x8] sm:$0xff]
    %v56 = vld [vmem:[%s1 + $0x10] sm:$0xff]
    %v57 = vld [vmem:[%s1 + $0x18] sm:$0xff]
    %v58 = vld [vmem:[%s1 + $0x20] sm:$0xff]
    %v59 = vld [vmem:[%s1 + $0x28] sm:$0xff]
    %v60 = vld [vmem:[%s1 + $0x30] sm:$0xff]
    %v61 = vld [vmem:[%s1 + $0x38] sm:$0xff]
    %v62 = vld [vmem:[#allocation5] sm:$0xf]
    %v63 = vld [vmem:[#allocation5 + $0x4] sm:$0xf]
    %v64 = vld [vmem:[#allocation5 + $0x8] sm:$0xf]
    %v65 = vld [vmem:[#allocation5 + $0xc] sm:$0xf]
    %v66 = vld [vmem:[#allocation5 + $0x10] sm:$0xf]
    %v67 = vld [vmem:[#allocation5 + $0x14] sm:$0xf]
    %v68 = vld [vmem:[#allocation5 + $0x18] sm:$0xf]
    %v69 = vld [vmem:[#allocation5 + $0x1c] sm:$0xf]
    %v70 = vld [vmem:[#allocation5 + $0x20] sm:$0xf]
    %v71 = vld [vmem:[#allocation5 + $0x24] sm:$0xf]
    %v72 = vld [vmem:[#allocation5 + $0x28] sm:$0xf]
    %v73 = vld [vmem:[#allocation5 + $0x2c] sm:$0xf]
    %v74 = vld [vmem:[#allocation5 + $0x30] sm:$0xf]
    %v75 = vld [vmem:[#allocation5 + $0x34] sm:$0xf]
    %v76 = vld [vmem:[#allocation5 + $0x38] sm:$0xf]
    %v77 = vld [vmem:[#allocation5 + $0x3c] sm:$0xf]
    %v78 = vld [vmem:[#allocation5 + $0x40] sm:$0xf]
    %v79 = vld [vmem:[#allocation5 + $0x44] sm:$0xf]
    %v80 = vld [vmem:[#allocation5 + $0x48] sm:$0xf]
    %v81 = vld [vmem:[#allocation5 + $0x4c] sm:$0xf]
    %v82 = vld [vmem:[#allocation5 + $0x50] sm:$0xf]
    %v83 = vld [vmem:[#allocation5 + $0x54] sm:$0xf]
    %v84 = vld [vmem:[#allocation5 + $0x58] sm:$0xf]
    %v85 = vld [vmem:[#allocation5 + $0x5c] sm:$0xf]
    %v86 = vld [vmem:[#allocation5 + $0x60] sm:$0xf]
    %v87 = vld [vmem:[#allocation5 + $0x64] sm:$0xf]
    %v88 = vld [vmem:[#allocation5 + $0x68] sm:$0xf]
    %v89 = vld [vmem:[#allocation5 + $0x6c] sm:$0xf]
    %v90 = vld [vmem:[#allocation5 + $0x70] sm:$0xf]
    %v91 = vld [vmem:[#allocation5 + $0x74] sm:$0xf]
    %v92 = vld [vmem:[#allocation5 + $0x78] sm:$0xf]
    %v93 = vld [vmem:[#allocation5 + $0x7c] sm:$0xf]
    %v94 = vld [vmem:[#allocation5 + $0x80] sm:$0xf]
    %v95 = vld [vmem:[#allocation5 + $0x84] sm:$0xf]
    %v96 = vld [vmem:[#allocation5 + $0x88] sm:$0xf]
    %v97 = vld [vmem:[#allocation5 + $0x8c] sm:$0xf]
    %v98 = vld [vmem:[#allocation5 + $0x90] sm:$0xf]
    %v99 = vld [vmem:[#allocation5 + $0x94] sm:$0xf]
    %v100 = vld [vmem:[#allocation5 + $0x98] sm:$0xf]
    %v101 = vld [vmem:[#allocation5 + $0x9c] sm:$0xf]
    %v102 = vld [vmem:[#allocation5 + $0xa0] sm:$0xf]
    %v103 = vld [vmem:[#allocation5 + $0xa4] sm:$0xf]
    %v104 = vld [vmem:[#allocation5 + $0xa8] sm:$0xf]
    %v105 = vld [vmem:[#allocation5 + $0xac] sm:$0xf]
    %v106 = vld [vmem:[#allocation5 + $0xb0] sm:$0xf]
    %v107 = vld [vmem:[#allocation5 + $0xb4] sm:$0xf]
    %v108 = vld [vmem:[#allocation5 + $0xb8] sm:$0xf]
    %v109 = vld [vmem:[#allocation5 + $0xbc] sm:$0xf]
    %v110 = vld [vmem:[#allocation5 + $0xc0] sm:$0xf]
    %v111 = vld [vmem:[#allocation5 + $0xc4] sm:$0xf]
    %v112 = vld [vmem:[#allocation5 + $0xc8] sm:$0xf]
    %v113 = vld [vmem:[#allocation5 + $0xcc] sm:$0xf]
    %v114 = vld [vmem:[#allocation5 + $0xd0] sm:$0xf]
    %v115 = vld [vmem:[#allocation5 + $0xd4] sm:$0xf]
    %v116 = vld [vmem:[#allocation5 + $0xd8] sm:$0xf]
    %v117 = vld [vmem:[#allocation5 + $0xdc] sm:$0xf]
    %v118 = vld [vmem:[#allocation5 + $0xe0] sm:$0xf]
    %v119 = vld [vmem:[#allocation5 + $0xe4] sm:$0xf]
    %v120 = vld [vmem:[#allocation5 + $0xe8] sm:$0xf]
    %v121 = vld [vmem:[#allocation5 + $0xec] sm:$0xf]
    %v122 = vld [vmem:[#allocation5 + $0xf0] sm:$0xf]
    %v123 = vld [vmem:[#allocation5 + $0xf4] sm:$0xf]
    %v124 = vld [vmem:[#allocation5 + $0xf8] sm:$0xf]
    %v125 = vld [vmem:[#allocation5 + $0xfc] sm:$0xf]
    %v126 = vld [vmem:[#allocation5 + $0x100] sm:$0xf]
    %v127 = vld [vmem:[#allocation5 + $0x104] sm:$0xf]
    %v128 = vld [vmem:[#allocation5 + $0x108] sm:$0xf]
    %v129 = vld [vmem:[#allocation5 + $0x10c] sm:$0xf]
    %v130 = vld [vmem:[#allocation5 + $0x110] sm:$0xf]
    %v131 = vld [vmem:[#allocation5 + $0x114] sm:$0xf]
    %v132 = vld [vmem:[#allocation5 + $0x118] sm:$0xf]
    %v133 = vld [vmem:[#allocation5 + $0x11c] sm:$0xf]
    %v134 = vld [vmem:[#allocation5 + $0x120] sm:$0xf]
    %v135 = vld [vmem:[#allocation5 + $0x124] sm:$0xf]
    %v136 = vld [vmem:[#allocation5 + $0x128] sm:$0xf]
    %v137 = vld [vmem:[#allocation5 + $0x12c] sm:$0xf]
    %v138 = vld [vmem:[#allocation5 + $0x130] sm:$0xf]
    %v139 = vld [vmem:[#allocation5 + $0x134] sm:$0xf]
    %v140 = vld [vmem:[#allocation5 + $0x138] sm:$0xf]
    %v141 = vld [vmem:[#allocation5 + $0x13c] sm:$0xf]
    %v142 = vld [vmem:[#allocation5 + $0x140] sm:$0xf]
    %v143 = vld [vmem:[#allocation5 + $0x144] sm:$0xf]
    %v144 = vld [vmem:[#allocation5 + $0x148] sm:$0xf]
    %v145 = vld [vmem:[#allocation5 + $0x14c] sm:$0xf]
    %v146 = vld [vmem:[#allocation5 + $0x150] sm:$0xf]
    %v147 = vld [vmem:[#allocation5 + $0x154] sm:$0xf]
    %v148 = vld [vmem:[#allocation5 + $0x158] sm:$0xf]
    %v149 = vld [vmem:[#allocation5 + $0x15c] sm:$0xf]
    %v150 = vld [vmem:[#allocation5 + $0x160] sm:$0xf]
    %v151 = vld [vmem:[#allocation5 + $0x164] sm:$0xf]
    %v152 = vld [vmem:[#allocation5 + $0x168] sm:$0xf]
    %v153 = vld [vmem:[#allocation5 + $0x16c] sm:$0xf]
    %v154 = vld [vmem:[#allocation5 + $0x170] sm:$0xf]
    %v155 = vld [vmem:[#allocation5 + $0x174] sm:$0xf]
    %v156 = vld [vmem:[#allocation5 + $0x178] sm:$0xf]
    %v157 = vld [vmem:[#allocation5 + $0x17c] sm:$0xf]
    %v158 = vld [vmem:[#allocation5 + $0x180] sm:$0xf]
    %v159 = vld [vmem:[#allocation5 + $0x184] sm:$0xf]
    %v160 = vld [vmem:[#allocation5 + $0x188] sm:$0xf]
    %v161 = vld [vmem:[#allocation5 + $0x18c] sm:$0xf]
    %v162 = vld [vmem:[#allocation5 + $0x190] sm:$0xf]
    %v163 = vld [vmem:[#allocation5 + $0x194] sm:$0xf]
    %v164 = vld [vmem:[#allocation5 + $0x198] sm:$0xf]
    %v165 = vld [vmem:[#allocation5 + $0x19c] sm:$0xf]
    %v166 = vld [vmem:[#allocation5 + $0x1a0] sm:$0xf]
    %v167 = vld [vmem:[#allocation5 + $0x1a4] sm:$0xf]
    %v168 = vld [vmem:[#allocation5 + $0x1a8] sm:$0xf]
    %v169 = vld [vmem:[#allocation5 + $0x1ac] sm:$0xf]
    %v170 = vld [vmem:[#allocation5 + $0x1b0] sm:$0xf]
    %v171 = vld [vmem:[#allocation5 + $0x1b4] sm:$0xf]
    %v172 = vld [vmem:[#allocation5 + $0x1b8] sm:$0xf]
    %v173 = vld [vmem:[#allocation5 + $0x1bc] sm:$0xf]
    %v174 = vld [vmem:[#allocation5 + $0x1c0] sm:$0xf]
    %v175 = vld [vmem:[#allocation5 + $0x1c4] sm:$0xf]
    %v176 = vld [vmem:[#allocation5 + $0x1c8] sm:$0xf]
    %v177 = vld [vmem:[#allocation5 + $0x1cc] sm:$0xf]
    %v178 = vld [vmem:[#allocation5 + $0x1d0] sm:$0xf]
    %v179 = vld [vmem:[#allocation5 + $0x1d4] sm:$0xf]
    %v180 = vld [vmem:[#allocation5 + $0x1d8] sm:$0xf]
    %v181 = vld [vmem:[#allocation5 + $0x1dc] sm:$0xf]
    %v182 = vld [vmem:[#allocation5 + $0x1e0] sm:$0xf]
    %v183 = vld [vmem:[#allocation5 + $0x1e4] sm:$0xf]
    %v184 = vld [vmem:[#allocation5 + $0x1e8] sm:$0xf]
    %v185 = vld [vmem:[#allocation5 + $0x1ec] sm:$0xf]
    %v186 = vld [vmem:[#allocation5 + $0x1f0] sm:$0xf]
    %v187 = vld [vmem:[#allocation5 + $0x1f4] sm:$0xf]
    %v188 = vld [vmem:[#allocation5 + $0x1f8] sm:$0xf]
    %v189 = vld [vmem:[#allocation5 + $0x1fc] sm:$0xf]
    %v190 = vlaneseq
    %v191 = vshrl.u32 %v190, 7
    %v192 = vsub.s32 1, %v191
    %v193 = vrot.slane %v53, %v192
    %v202 = vunpack.c.l.b16 %v54
    %v203 = vunpack.c.h.b16 %v54
    %v204 = vunpack.c.l.b16 %v55
    %v205 = vunpack.c.h.b16 %v55
    %v206 = vunpack.c.l.b16 %v56
    %v207 = vunpack.c.h.b16 %v56
    %v208 = vunpack.c.l.b16 %v57
    %v209 = vunpack.c.h.b16 %v57
    %v210 = vunpack.c.l.b16 %v58
    %v211 = vunpack.c.h.b16 %v58
    %v212 = vunpack.c.l.b16 %v59
    %v213 = vunpack.c.h.b16 %v59
    %v214 = vunpack.c.l.b16 %v60
    %v215 = vunpack.c.h.b16 %v60
    %v216 = vunpack.c.l.b16 %v61
    %v217 = vunpack.c.h.b16 %v61
    %v218 = vpack.c.b16 %v210, %v202
    %v219 = vpack.c.b16 %v211, %v203
    %v220 = vpack.c.b16 %v212, %v204
    %v221 = vpack.c.b16 %v213, %v205
    %v222 = vpack.c.b16 %v214, %v206
    %v223 = vpack.c.b16 %v215, %v207
    %v224 = vpack.c.b16 %v216, %v208
    %v225 = vpack.c.b16 %v217, %v209
    %v362 = vunpack.c.l.b16 %v62
    %v363 = vunpack.c.l.b16 %v63
    %v364 = vunpack.c.l.b16 %v64
    %v365 = vunpack.c.l.b16 %v65
    %v366 = vunpack.c.l.b16 %v66
    %v367 = vunpack.c.l.b16 %v67
    %v368 = vunpack.c.l.b16 %v68
    %v369 = vunpack.c.l.b16 %v69
    %v370 = vunpack.c.l.b16 %v70
    %v371 = vunpack.c.l.b16 %v71
    %v372 = vunpack.c.l.b16 %v72
    %v373 = vunpack.c.l.b16 %v73
    %v374 = vunpack.c.l.b16 %v74
    %v375 = vunpack.c.l.b16 %v75
    %v376 = vunpack.c.l.b16 %v76
    %v377 = vunpack.c.l.b16 %v77
    %v378 = vunpack.c.l.b16 %v78
    %v379 = vunpack.c.l.b16 %v79
    %v380 = vunpack.c.l.b16 %v80
    %v381 = vunpack.c.l.b16 %v81
    %v382 = vunpack.c.l.b16 %v82
    %v383 = vunpack.c.l.b16 %v83
    %v384 = vunpack.c.l.b16 %v84
    %v385 = vunpack.c.l.b16 %v85
    %v386 = vunpack.c.l.b16 %v86
    %v387 = vunpack.c.l.b16 %v87
    %v388 = vunpack.c.l.b16 %v88
    %v389 = vunpack.c.l.b16 %v89
    %v390 = vunpack.c.l.b16 %v90
    %v391 = vunpack.c.l.b16 %v91
    %v392 = vunpack.c.l.b16 %v92
    %v393 = vunpack.c.l.b16 %v93
    %v394 = vunpack.c.l.b16 %v94
    %v395 = vunpack.c.l.b16 %v95
    %v396 = vunpack.c.l.b16 %v96
    %v397 = vunpack.c.l.b16 %v97
    %v398 = vunpack.c.l.b16 %v98
    %v399 = vunpack.c.l.b16 %v99
    %v400 = vunpack.c.l.b16 %v100
    %v401 = vunpack.c.l.b16 %v101
    %v402 = vunpack.c.l.b16 %v102
    %v403 = vunpack.c.l.b16 %v103
    %v404 = vunpack.c.l.b16 %v104
    %v405 = vunpack.c.l.b16 %v105
    %v406 = vunpack.c.l.b16 %v106
    %v407 = vunpack.c.l.b16 %v107
    %v408 = vunpack.c.l.b16 %v108
    %v409 = vunpack.c.l.b16 %v109
    %v410 = vunpack.c.l.b16 %v110
    %v411 = vunpack.c.l.b16 %v111
    %v412 = vunpack.c.l.b16 %v112
    %v413 = vunpack.c.l.b16 %v113
    %v414 = vunpack.c.l.b16 %v114
    %v415 = vunpack.c.l.b16 %v115
    %v416 = vunpack.c.l.b16 %v116
    %v417 = vunpack.c.l.b16 %v117
    %v418 = vunpack.c.l.b16 %v118
    %v419 = vunpack.c.l.b16 %v119
    %v420 = vunpack.c.l.b16 %v120
    %v421 = vunpack.c.l.b16 %v121
    %v422 = vunpack.c.l.b16 %v122
    %v423 = vunpack.c.l.b16 %v123
    %v424 = vunpack.c.l.b16 %v124
    %v425 = vunpack.c.l.b16 %v125
    %v426 = vunpack.c.l.b16 %v126
    %v427 = vunpack.c.l.b16 %v127
    %v428 = vunpack.c.l.b16 %v128
    %v429 = vunpack.c.l.b16 %v129
    %v430 = vunpack.c.l.b16 %v130
    %v431 = vunpack.c.l.b16 %v131
    %v432 = vunpack.c.l.b16 %v132
    %v433 = vunpack.c.l.b16 %v133
    %v434 = vunpack.c.l.b16 %v134
    %v435 = vunpack.c.l.b16 %v135
    %v436 = vunpack.c.l.b16 %v136
    %v437 = vunpack.c.l.b16 %v137
    %v438 = vunpack.c.l.b16 %v138
    %v439 = vunpack.c.l.b16 %v139
    %v440 = vunpack.c.l.b16 %v140
    %v441 = vunpack.c.l.b16 %v141
    %v442 = vunpack.c.l.b16 %v142
    %v443 = vunpack.c.l.b16 %v143
    %v444 = vunpack.c.l.b16 %v144
    %v445 = vunpack.c.l.b16 %v145
    %v446 = vunpack.c.l.b16 %v146
    %v447 = vunpack.c.l.b16 %v147
    %v448 = vunpack.c.l.b16 %v148
    %v449 = vunpack.c.l.b16 %v149
    %v450 = vunpack.c.l.b16 %v150
    %v451 = vunpack.c.l.b16 %v151
    %v452 = vunpack.c.l.b16 %v152
    %v453 = vunpack.c.l.b16 %v153
    %v454 = vunpack.c.l.b16 %v154
    %v455 = vunpack.c.l.b16 %v155
    %v456 = vunpack.c.l.b16 %v156
    %v457 = vunpack.c.l.b16 %v157
    %v458 = vunpack.c.l.b16 %v158
    %v459 = vunpack.c.l.b16 %v159
    %v460 = vunpack.c.l.b16 %v160
    %v461 = vunpack.c.l.b16 %v161
    %v462 = vunpack.c.l.b16 %v162
    %v463 = vunpack.c.l.b16 %v163
    %v464 = vunpack.c.l.b16 %v164
    %v465 = vunpack.c.l.b16 %v165
    %v466 = vunpack.c.l.b16 %v166
    %v467 = vunpack.c.l.b16 %v167
    %v468 = vunpack.c.l.b16 %v168
    %v469 = vunpack.c.l.b16 %v169
    %v470 = vunpack.c.l.b16 %v170
    %v471 = vunpack.c.l.b16 %v171
    %v472 = vunpack.c.l.b16 %v172
    %v473 = vunpack.c.l.b16 %v173
    %v474 = vunpack.c.l.b16 %v174
    %v475 = vunpack.c.l.b16 %v175
    %v476 = vunpack.c.l.b16 %v176
    %v477 = vunpack.c.l.b16 %v177
    %v478 = vunpack.c.l.b16 %v178
    %v479 = vunpack.c.l.b16 %v179
    %v480 = vunpack.c.l.b16 %v180
    %v481 = vunpack.c.l.b16 %v181
    %v482 = vunpack.c.l.b16 %v182
    %v483 = vunpack.c.l.b16 %v183
    %v484 = vunpack.c.l.b16 %v184
    %v485 = vunpack.c.l.b16 %v185
    %v486 = vunpack.c.l.b16 %v186
    %v487 = vunpack.c.l.b16 %v187
    %v488 = vunpack.c.l.b16 %v188
    %v489 = vunpack.c.l.b16 %v189
    %v490 = vpack.c.b16 %v363, %v362
    %v491 = vpack.c.b16 %v365, %v364
    %v492 = vpack.c.b16 %v367, %v366
    %v493 = vpack.c.b16 %v369, %v368
    %v494 = vpack.c.b16 %v371, %v370
    %v495 = vpack.c.b16 %v373, %v372
    %v496 = vpack.c.b16 %v375, %v374
    %v497 = vpack.c.b16 %v377, %v376
    %v498 = vpack.c.b16 %v379, %v378
    %v499 = vpack.c.b16 %v381, %v380
    %v500 = vpack.c.b16 %v383, %v382
    %v501 = vpack.c.b16 %v385, %v384
    %v502 = vpack.c.b16 %v387, %v386
    %v503 = vpack.c.b16 %v389, %v388
    %v504 = vpack.c.b16 %v391, %v390
    %v505 = vpack.c.b16 %v393, %v392
    %v506 = vpack.c.b16 %v395, %v394
    %v507 = vpack.c.b16 %v397, %v396
    %v508 = vpack.c.b16 %v399, %v398
    %v509 = vpack.c.b16 %v401, %v400
    %v510 = vpack.c.b16 %v403, %v402
    %v511 = vpack.c.b16 %v405, %v404
    %v512 = vpack.c.b16 %v407, %v406
    %v513 = vpack.c.b16 %v409, %v408
    %v514 = vpack.c.b16 %v411, %v410
    %v515 = vpack.c.b16 %v413, %v412
    %v516 = vpack.c.b16 %v415, %v414
    %v517 = vpack.c.b16 %v417, %v416
    %v518 = vpack.c.b16 %v419, %v418
    %v519 = vpack.c.b16 %v421, %v420
    %v520 = vpack.c.b16 %v423, %v422
    %v521 = vpack.c.b16 %v425, %v424
    %v522 = vpack.c.b16 %v427, %v426
    %v523 = vpack.c.b16 %v429, %v428
    %v524 = vpack.c.b16 %v431, %v430
    %v525 = vpack.c.b16 %v433, %v432
    %v526 = vpack.c.b16 %v435, %v434
    %v527 = vpack.c.b16 %v437, %v436
    %v528 = vpack.c.b16 %v439, %v438
    %v529 = vpack.c.b16 %v441, %v440
    %v530 = vpack.c.b16 %v443, %v442
    %v531 = vpack.c.b16 %v445, %v444
    %v532 = vpack.c.b16 %v447, %v446
    %v533 = vpack.c.b16 %v449, %v448
    %v534 = vpack.c.b16 %v451, %v450
    %v535 = vpack.c.b16 %v453, %v452
    %v536 = vpack.c.b16 %v455, %v454
    %v537 = vpack.c.b16 %v457, %v456
    %v538 = vpack.c.b16 %v459, %v458
    %v539 = vpack.c.b16 %v461, %v460
    %v540 = vpack.c.b16 %v463, %v462
    %v541 = vpack.c.b16 %v465, %v464
    %v542 = vpack.c.b16 %v467, %v466
    %v543 = vpack.c.b16 %v469, %v468
    %v544 = vpack.c.b16 %v471, %v470
    %v545 = vpack.c.b16 %v473, %v472
    %v546 = vpack.c.b16 %v475, %v474
    %v547 = vpack.c.b16 %v477, %v476
    %v548 = vpack.c.b16 %v479, %v478
    %v549 = vpack.c.b16 %v481, %v480
    %v550 = vpack.c.b16 %v483, %v482
    %v551 = vpack.c.b16 %v485, %v484
    %v552 = vpack.c.b16 %v487, %v486
    %v553 = vpack.c.b16 %v489, %v488
    %618 = vmatprep.subr.bf16.mxu0 0
    %619 = vmatpush1.bf16.msra.mxu0 %v490
    %620 = vmatprep.subr.bf16.mxu0 0
    %621 = vmatpush1.bf16.msra.mxu0 %v491
    %622 = vmatprep.subr.bf16.mxu0 0
    %623 = vmatpush1.bf16.msra.mxu0 %v492
    %624 = vmatprep.subr.bf16.mxu0 0
    %625 = vmatpush1.bf16.msra.mxu0 %v493
    %626 = vmatprep.subr.bf16.mxu0 0
    %627 = vmatpush1.bf16.msra.mxu0 %v494
    %628 = vmatprep.subr.bf16.mxu0 0
    %629 = vmatpush1.bf16.msra.mxu0 %v495
    %630 = vmatprep.subr.bf16.mxu0 0
    %631 = vmatpush1.bf16.msra.mxu0 %v496
    %632 = vmatprep.subr.bf16.mxu0 0
    %633 = vmatpush1.bf16.msra.mxu0 %v497
    %634 = vmatprep.subr.bf16.mxu0 0
    %635 = vmatpush1.bf16.msra.mxu0 %v498
    %636 = vmatprep.subr.bf16.mxu0 0
    %637 = vmatpush1.bf16.msra.mxu0 %v499
    %638 = vmatprep.subr.bf16.mxu0 0
    %639 = vmatpush1.bf16.msra.mxu0 %v500
    %640 = vmatprep.subr.bf16.mxu0 0
    %641 = vmatpush1.bf16.msra.mxu0 %v501
    %642 = vmatprep.subr.bf16.mxu0 0
    %643 = vmatpush1.bf16.msra.mxu0 %v502
    %644 = vmatprep.subr.bf16.mxu0 0
    %645 = vmatpush1.bf16.msra.mxu0 %v503
    %646 = vmatprep.subr.bf16.mxu0 0
    %647 = vmatpush1.bf16.msra.mxu0 %v504
    %648 = vmatprep.subr.bf16.mxu0 0
    %649 = vmatpush1.bf16.msra.mxu0 %v505
    %650 = vmatprep.mubr.bf16.mxu0 %v219
    %651 = vmatmul.mubr.bf16.gmra.mrb[0].mxu0 %v218
    %v652 = vpop.f32.mrb[0].mxu0
    %v653 = vadd.f32 %v193, %v652
    %v654 = vpop.f32.mrb[0].mxu0
    %v655 = vpop.f32.mrb[0].mxu0
    %v656 = vadd.f32 %v193, %v655
    %v657 = vpop.f32.mrb[0].mxu0
    %658 = vdwg.mxu0
    %659 = vmatprep.subr.bf16.mxu0 0
    %660 = vmatpush1.bf16.msra.mxu0 %v506
    %661 = vmatprep.subr.bf16.mxu0 0
    %662 = vmatpush1.bf16.msra.mxu0 %v507
    %663 = vmatprep.subr.bf16.mxu0 0
    %664 = vmatpush1.bf16.msra.mxu0 %v508
    %665 = vmatprep.subr.bf16.mxu0 0
    %666 = vmatpush1.bf16.msra.mxu0 %v509
    %667 = vmatprep.subr.bf16.mxu0 0
    %668 = vmatpush1.bf16.msra.mxu0 %v510
    %669 = vmatprep.subr.bf16.mxu0 0
    %670 = vmatpush1.bf16.msra.mxu0 %v511
    %671 = vmatprep.subr.bf16.mxu0 0
    %672 = vmatpush1.bf16.msra.mxu0 %v512
    %673 = vmatprep.subr.bf16.mxu0 0
    %674 = vmatpush1.bf16.msra.mxu0 %v513
    %675 = vmatprep.subr.bf16.mxu0 0
    %676 = vmatpush1.bf16.msra.mxu0 %v514
    %677 = vmatprep.subr.bf16.mxu0 0
    %678 = vmatpush1.bf16.msra.mxu0 %v515
    %679 = vmatprep.subr.bf16.mxu0 0
    %680 = vmatpush1.bf16.msra.mxu0 %v516
    %681 = vmatprep.subr.bf16.mxu0 0
    %682 = vmatpush1.bf16.msra.mxu0 %v517
    %683 = vmatprep.subr.bf16.mxu0 0
    %684 = vmatpush1.bf16.msra.mxu0 %v518
    %685 = vmatprep.subr.bf16.mxu0 0
    %686 = vmatpush1.bf16.msra.mxu0 %v519
    %687 = vmatprep.subr.bf16.mxu0 0
    %688 = vmatpush1.bf16.msra.mxu0 %v520
    %689 = vmatprep.subr.bf16.mxu0 0
    %690 = vmatpush1.bf16.msra.mxu0 %v521
    %691 = vmatprep.mubr.bf16.mxu0 %v221
    %692 = vmatmul.mubr.bf16.gmra.mrb[0].mxu0 %v220
    %v693 = vpop.f32.mrb[0].mxu0
    %v694 = vadd.f32 %v653, %v693
    %v695 = vpop.f32.mrb[0].mxu0
    %v696 = vpop.f32.mrb[0].mxu0
    %v697 = vadd.f32 %v656, %v696
    %v698 = vpop.f32.mrb[0].mxu0
    %699 = vdwg.mxu0
    %700 = vmatprep.subr.bf16.mxu0 0
    %701 = vmatpush1.bf16.msra.mxu0 %v522
    %702 = vmatprep.subr.bf16.mxu0 0
    %703 = vmatpush1.bf16.msra.mxu0 %v523
    %704 = vmatprep.subr.bf16.mxu0 0
    %705 = vmatpush1.bf16.msra.mxu0 %v524
    %706 = vmatprep.subr.bf16.mxu0 0
    %707 = vmatpush1.bf16.msra.mxu0 %v525
    %708 = vmatprep.subr.bf16.mxu0 0
    %709 = vmatpush1.bf16.msra.mxu0 %v526
    %710 = vmatprep.subr.bf16.mxu0 0
    %711 = vmatpush1.bf16.msra.mxu0 %v527
    %712 = vmatprep.subr.bf16.mxu0 0
    %713 = vmatpush1.bf16.msra.mxu0 %v528
    %714 = vmatprep.subr.bf16.mxu0 0
    %715 = vmatpush1.bf16.msra.mxu0 %v529
    %716 = vmatprep.subr.bf16.mxu0 0
    %717 = vmatpush1.bf16.msra.mxu0 %v530
    %718 = vmatprep.subr.bf16.mxu0 0
    %719 = vmatpush1.bf16.msra.mxu0 %v531
    %720 = vmatprep.subr.bf16.mxu0 0
    %721 = vmatpush1.bf16.msra.mxu0 %v532
    %722 = vmatprep.subr.bf16.mxu0 0
    %723 = vmatpush1.bf16.msra.mxu0 %v533
    %724 = vmatprep.subr.bf16.mxu0 0
    %725 = vmatpush1.bf16.msra.mxu0 %v534
    %726 = vmatprep.subr.bf16.mxu0 0
    %727 = vmatpush1.bf16.msra.mxu0 %v535
    %728 = vmatprep.subr.bf16.mxu0 0
    %729 = vmatpush1.bf16.msra.mxu0 %v536
    %730 = vmatprep.subr.bf16.mxu0 0
    %731 = vmatpush1.bf16.msra.mxu0 %v537
    %732 = vmatprep.mubr.bf16.mxu0 %v223
    %733 = vmatmul.mubr.bf16.gmra.mrb[0].mxu0 %v222
    %v734 = vpop.f32.mrb[0].mxu0
    %v735 = vadd.f32 %v694, %v734
    %v736 = vpop.f32.mrb[0].mxu0
    %v737 = vpop.f32.mrb[0].mxu0
    %v738 = vadd.f32 %v697, %v737
    %v739 = vpop.f32.mrb[0].mxu0
    %740 = vdwg.mxu0
    %741 = vmatprep.subr.bf16.mxu0 0
    %742 = vmatpush1.bf16.msra.mxu0 %v538
    %743 = vmatprep.subr.bf16.mxu0 0
    %744 = vmatpush1.bf16.msra.mxu0 %v539
    %745 = vmatprep.subr.bf16.mxu0 0
    %746 = vmatpush1.bf16.msra.mxu0 %v540
    %747 = vmatprep.subr.bf16.mxu0 0
    %748 = vmatpush1.bf16.msra.mxu0 %v541
    %749 = vmatprep.subr.bf16.mxu0 0
    %750 = vmatpush1.bf16.msra.mxu0 %v542
    %751 = vmatprep.subr.bf16.mxu0 0
    %752 = vmatpush1.bf16.msra.mxu0 %v543
    %753 = vmatprep.subr.bf16.mxu0 0
    %754 = vmatpush1.bf16.msra.mxu0 %v544
    %755 = vmatprep.subr.bf16.mxu0 0
    %756 = vmatpush1.bf16.msra.mxu0 %v545
    %757 = vmatprep.subr.bf16.mxu0 0
    %758 = vmatpush1.bf16.msra.mxu0 %v546
    %759 = vmatprep.subr.bf16.mxu0 0
    %760 = vmatpush1.bf16.msra.mxu0 %v547
    %761 = vmatprep.subr.bf16.mxu0 0
    %762 = vmatpush1.bf16.msra.mxu0 %v548
    %763 = vmatprep.subr.bf16.mxu0 0
    %764 = vmatpush1.bf16.msra.mxu0 %v549
    %765 = vmatprep.subr.bf16.mxu0 0
    %766 = vmatpush1.bf16.msra.mxu0 %v550
    %767 = vmatprep.subr.bf16.mxu0 0
    %768 = vmatpush1.bf16.msra.mxu0 %v551
    %769 = vmatprep.subr.bf16.mxu0 0
    %770 = vmatpush1.bf16.msra.mxu0 %v552
    %771 = vmatprep.subr.bf16.mxu0 0
    %772 = vmatpush1.bf16.msra.mxu0 %v553
    %773 = vmatprep.mubr.bf16.mxu0 %v225
    %774 = vmatmul.mubr.bf16.gmra.mrb[0].mxu0 %v224
    %v775 = vpop.f32.mrb[0].mxu0
    %v776 = vadd.f32 %v735, %v775
    %v777 = vpop.f32.mrb[0].mxu0
    %v778 = vpop.f32.mrb[0].mxu0
    %v779 = vadd.f32 %v738, %v778
    %v780 = vpop.f32.mrb[0].mxu0
    %781 = vdwg.mxu0
    %v782 = vmax.f32 %v776, 0.0
    %v783 = vmax.f32 %v779, 0.0
    %v784 = vld [vmem:[%s0] sm:$0xff]
    %v785 = vld [vmem:[%s0 + $0x8] sm:$0xff]
    %v786 = vld [vmem:[%s0 + $0x10] sm:$0xff]
    %v787 = vld [vmem:[%s0 + $0x18] sm:$0xff]
    %v788 = vld [vmem:[%s0 + $0x20] sm:$0xff]
    %v789 = vld [vmem:[%s0 + $0x28] sm:$0xff]
    %v790 = vld [vmem:[#allocation2] sm:$0xf]
    %v791 = vld [vmem:[#allocation2 + $0x4] sm:$0xf]
    %v792 = vld [vmem:[#allocation2 + $0x8] sm:$0xf]
    %v793 = vld [vmem:[#allocation2 + $0xc] sm:$0xf]
    %v794 = vld [vmem:[#allocation2 + $0x10] sm:$0xf]
    %v795 = vld [vmem:[#allocation2 + $0x14] sm:$0xf]
    %v796 = vld [vmem:[#allocation2 + $0x18] sm:$0xf]
    %v797 = vld [vmem:[#allocation2 + $0x1c] sm:$0xf]
    %v798 = vld [vmem:[#allocation2 + $0x20] sm:$0xf]
    %v799 = vld [vmem:[#allocation2 + $0x24] sm:$0xf]
    %v800 = vld [vmem:[#allocation2 + $0x28] sm:$0xf]
    %v801 = vld [vmem:[#allocation2 + $0x2c] sm:$0xf]
    %v802 = vld [vmem:[#allocation2 + $0x30] sm:$0xf]
    %v803 = vld [vmem:[#allocation2 + $0x34] sm:$0xf]
    %v804 = vld [vmem:[#allocation2 + $0x38] sm:$0xf]
    %v805 = vld [vmem:[#allocation2 + $0x3c] sm:$0xf]
    %v806 = vld [vmem:[#allocation2 + $0x40] sm:$0xf]
    %v807 = vld [vmem:[#allocation2 + $0x44] sm:$0xf]
    %v808 = vld [vmem:[#allocation2 + $0x48] sm:$0xf]
    %v809 = vld [vmem:[#allocation2 + $0x4c] sm:$0xf]
    %v810 = vld [vmem:[#allocation2 + $0x50] sm:$0xf]
    %v811 = vld [vmem:[#allocation2 + $0x54] sm:$0xf]
    %v812 = vld [vmem:[#allocation2 + $0x58] sm:$0xf]
    %v813 = vld [vmem:[#allocation2 + $0x5c] sm:$0xf]
    %v814 = vld [vmem:[#allocation2 + $0x60] sm:$0xf]
    %v815 = vld [vmem:[#allocation2 + $0x64] sm:$0xf]
    %v816 = vld [vmem:[#allocation2 + $0x68] sm:$0xf]
    %v817 = vld [vmem:[#allocation2 + $0x6c] sm:$0xf]
    %v818 = vld [vmem:[#allocation2 + $0x70] sm:$0xf]
    %v819 = vld [vmem:[#allocation2 + $0x74] sm:$0xf]
    %v820 = vld [vmem:[#allocation2 + $0x78] sm:$0xf]
    %v821 = vld [vmem:[#allocation2 + $0x7c] sm:$0xf]
    %v822 = vld [vmem:[#allocation2 + $0x80] sm:$0xf]
    %v823 = vld [vmem:[#allocation2 + $0x84] sm:$0xf]
    %v824 = vld [vmem:[#allocation2 + $0x88] sm:$0xf]
    %v825 = vld [vmem:[#allocation2 + $0x8c] sm:$0xf]
    %v826 = vld [vmem:[#allocation2 + $0x90] sm:$0xf]
    %v827 = vld [vmem:[#allocation2 + $0x94] sm:$0xf]
    %v828 = vld [vmem:[#allocation2 + $0x98] sm:$0xf]
    %v829 = vld [vmem:[#allocation2 + $0x9c] sm:$0xf]
    %v830 = vld [vmem:[#allocation2 + $0xa0] sm:$0xf]
    %v831 = vld [vmem:[#allocation2 + $0xa4] sm:$0xf]
    %v832 = vld [vmem:[#allocation2 + $0xa8] sm:$0xf]
    %v833 = vld [vmem:[#allocation2 + $0xac] sm:$0xf]
    %v834 = vld [vmem:[#allocation2 + $0xb0] sm:$0xf]
    %v835 = vld [vmem:[#allocation2 + $0xb4] sm:$0xf]
    %v836 = vld [vmem:[#allocation2 + $0xb8] sm:$0xf]
    %v837 = vld [vmem:[#allocation2 + $0xbc] sm:$0xf]
    %v838 = vld [vmem:[#allocation2 + $0xc0] sm:$0xf]
    %v839 = vld [vmem:[#allocation2 + $0xc4] sm:$0xf]
    %v840 = vld [vmem:[#allocation2 + $0xc8] sm:$0xf]
    %v841 = vld [vmem:[#allocation2 + $0xcc] sm:$0xf]
    %v842 = vld [vmem:[#allocation2 + $0xd0] sm:$0xf]
    %v843 = vld [vmem:[#allocation2 + $0xd4] sm:$0xf]
    %v844 = vld [vmem:[#allocation2 + $0xd8] sm:$0xf]
    %v845 = vld [vmem:[#allocation2 + $0xdc] sm:$0xf]
    %v846 = vld [vmem:[#allocation2 + $0xe0] sm:$0xf]
    %v847 = vld [vmem:[#allocation2 + $0xe4] sm:$0xf]
    %v848 = vld [vmem:[#allocation2 + $0xe8] sm:$0xf]
    %v849 = vld [vmem:[#allocation2 + $0xec] sm:$0xf]
    %v850 = vld [vmem:[#allocation2 + $0xf0] sm:$0xf]
    %v851 = vld [vmem:[#allocation2 + $0xf4] sm:$0xf]
    %v852 = vld [vmem:[#allocation2 + $0xf8] sm:$0xf]
    %v853 = vld [vmem:[#allocation2 + $0xfc] sm:$0xf]
    %v854 = vld [vmem:[#allocation2 + $0x100] sm:$0xf]
    %v855 = vld [vmem:[#allocation2 + $0x104] sm:$0xf]
    %v856 = vld [vmem:[#allocation2 + $0x108] sm:$0xf]
    %v857 = vld [vmem:[#allocation2 + $0x10c] sm:$0xf]
    %v858 = vld [vmem:[#allocation2 + $0x110] sm:$0xf]
    %v859 = vld [vmem:[#allocation2 + $0x114] sm:$0xf]
    %v860 = vld [vmem:[#allocation2 + $0x118] sm:$0xf]
    %v861 = vld [vmem:[#allocation2 + $0x11c] sm:$0xf]
    %v862 = vld [vmem:[#allocation2 + $0x120] sm:$0xf]
    %v863 = vld [vmem:[#allocation2 + $0x124] sm:$0xf]
    %v864 = vld [vmem:[#allocation2 + $0x128] sm:$0xf]
    %v865 = vld [vmem:[#allocation2 + $0x12c] sm:$0xf]
    %v866 = vld [vmem:[#allocation2 + $0x130] sm:$0xf]
    %v867 = vld [vmem:[#allocation2 + $0x134] sm:$0xf]
    %v868 = vld [vmem:[#allocation2 + $0x138] sm:$0xf]
    %v869 = vld [vmem:[#allocation2 + $0x13c] sm:$0xf]
    %v870 = vld [vmem:[#allocation2 + $0x140] sm:$0xf]
    %v871 = vld [vmem:[#allocation2 + $0x144] sm:$0xf]
    %v872 = vld [vmem:[#allocation2 + $0x148] sm:$0xf]
    %v873 = vld [vmem:[#allocation2 + $0x14c] sm:$0xf]
    %v874 = vld [vmem:[#allocation2 + $0x150] sm:$0xf]
    %v875 = vld [vmem:[#allocation2 + $0x154] sm:$0xf]
    %v876 = vld [vmem:[#allocation2 + $0x158] sm:$0xf]
    %v877 = vld [vmem:[#allocation2 + $0x15c] sm:$0xf]
    %v878 = vld [vmem:[#allocation2 + $0x160] sm:$0xf]
    %v879 = vld [vmem:[#allocation2 + $0x164] sm:$0xf]
    %v880 = vld [vmem:[#allocation2 + $0x168] sm:$0xf]
    %v881 = vld [vmem:[#allocation2 + $0x16c] sm:$0xf]
    %v882 = vld [vmem:[#allocation2 + $0x170] sm:$0xf]
    %v883 = vld [vmem:[#allocation2 + $0x174] sm:$0xf]
    %v884 = vld [vmem:[#allocation2 + $0x178] sm:$0xf]
    %v885 = vld [vmem:[#allocation2 + $0x17c] sm:$0xf]
    %v886 = vlaneseq
    %v887 = vshrl.u32 %v886, 7
    %v888 = vsub.s32 0, %v887
    %v889 = vrot.slane %v53, %v888
    %v896 = vunpack.c.l.b16 %v784
    %v897 = vunpack.c.h.b16 %v784
    %v898 = vunpack.c.l.b16 %v785
    %v899 = vunpack.c.h.b16 %v785
    %v900 = vunpack.c.l.b16 %v786
    %v901 = vunpack.c.h.b16 %v786
    %v902 = vunpack.c.l.b16 %v787
    %v903 = vunpack.c.h.b16 %v787
    %v904 = vunpack.c.l.b16 %v788
    %v905 = vunpack.c.h.b16 %v788
    %v906 = vunpack.c.l.b16 %v789
    %v907 = vunpack.c.h.b16 %v789
    %v908 = vpack.c.b16 %v902, %v896
    %v909 = vpack.c.b16 %v903, %v897
    %v910 = vpack.c.b16 %v904, %v898
    %v911 = vpack.c.b16 %v905, %v899
    %v912 = vpack.c.b16 %v906, %v900
    %v913 = vpack.c.b16 %v907, %v901
    %v1016 = vunpack.c.l.b16 %v790
    %v1017 = vunpack.c.l.b16 %v791
    %v1018 = vunpack.c.l.b16 %v792
    %v1019 = vunpack.c.l.b16 %v793
    %v1020 = vunpack.c.l.b16 %v794
    %v1021 = vunpack.c.l.b16 %v795
    %v1022 = vunpack.c.l.b16 %v796
    %v1023 = vunpack.c.l.b16 %v797
    %v1024 = vunpack.c.l.b16 %v798
    %v1025 = vunpack.c.l.b16 %v799
    %v1026 = vunpack.c.l.b16 %v800
    %v1027 = vunpack.c.l.b16 %v801
    %v1028 = vunpack.c.l.b16 %v802
    %v1029 = vunpack.c.l.b16 %v803
    %v1030 = vunpack.c.l.b16 %v804
    %v1031 = vunpack.c.l.b16 %v805
    %v1032 = vunpack.c.l.b16 %v806
    %v1033 = vunpack.c.l.b16 %v807
    %v1034 = vunpack.c.l.b16 %v808
    %v1035 = vunpack.c.l.b16 %v809
    %v1036 = vunpack.c.l.b16 %v810
    %v1037 = vunpack.c.l.b16 %v811
    %v1038 = vunpack.c.l.b16 %v812
    %v1039 = vunpack.c.l.b16 %v813
    %v1040 = vunpack.c.l.b16 %v814
    %v1041 = vunpack.c.l.b16 %v815
    %v1042 = vunpack.c.l.b16 %v816
    %v1043 = vunpack.c.l.b16 %v817
    %v1044 = vunpack.c.l.b16 %v818
    %v1045 = vunpack.c.l.b16 %v819
    %v1046 = vunpack.c.l.b16 %v820
    %v1047 = vunpack.c.l.b16 %v821
    %v1048 = vunpack.c.l.b16 %v822
    %v1049 = vunpack.c.l.b16 %v823
    %v1050 = vunpack.c.l.b16 %v824
    %v1051 = vunpack.c.l.b16 %v825
    %v1052 = vunpack.c.l.b16 %v826
    %v1053 = vunpack.c.l.b16 %v827
    %v1054 = vunpack.c.l.b16 %v828
    %v1055 = vunpack.c.l.b16 %v829
    %v1056 = vunpack.c.l.b16 %v830
    %v1057 = vunpack.c.l.b16 %v831
    %v1058 = vunpack.c.l.b16 %v832
    %v1059 = vunpack.c.l.b16 %v833
    %v1060 = vunpack.c.l.b16 %v834
    %v1061 = vunpack.c.l.b16 %v835
    %v1062 = vunpack.c.l.b16 %v836
    %v1063 = vunpack.c.l.b16 %v837
    %v1064 = vunpack.c.l.b16 %v838
    %v1065 = vunpack.c.l.b16 %v839
    %v1066 = vunpack.c.l.b16 %v840
    %v1067 = vunpack.c.l.b16 %v841
    %v1068 = vunpack.c.l.b16 %v842
    %v1069 = vunpack.c.l.b16 %v843
    %v1070 = vunpack.c.l.b16 %v844
    %v1071 = vunpack.c.l.b16 %v845
    %v1072 = vunpack.c.l.b16 %v846
    %v1073 = vunpack.c.l.b16 %v847
    %v1074 = vunpack.c.l.b16 %v848
    %v1075 = vunpack.c.l.b16 %v849
    %v1076 = vunpack.c.l.b16 %v850
    %v1077 = vunpack.c.l.b16 %v851
    %v1078 = vunpack.c.l.b16 %v852
    %v1079 = vunpack.c.l.b16 %v853
    %v1080 = vunpack.c.l.b16 %v854
    %v1081 = vunpack.c.l.b16 %v855
    %v1082 = vunpack.c.l.b16 %v856
    %v1083 = vunpack.c.l.b16 %v857
    %v1084 = vunpack.c.l.b16 %v858
    %v1085 = vunpack.c.l.b16 %v859
    %v1086 = vunpack.c.l.b16 %v860
    %v1087 = vunpack.c.l.b16 %v861
    %v1088 = vunpack.c.l.b16 %v862
    %v1089 = vunpack.c.l.b16 %v863
    %v1090 = vunpack.c.l.b16 %v864
    %v1091 = vunpack.c.l.b16 %v865
    %v1092 = vunpack.c.l.b16 %v866
    %v1093 = vunpack.c.l.b16 %v867
    %v1094 = vunpack.c.l.b16 %v868
    %v1095 = vunpack.c.l.b16 %v869
    %v1096 = vunpack.c.l.b16 %v870
    %v1097 = vunpack.c.l.b16 %v871
    %v1098 = vunpack.c.l.b16 %v872
    %v1099 = vunpack.c.l.b16 %v873
    %v1100 = vunpack.c.l.b16 %v874
    %v1101 = vunpack.c.l.b16 %v875
    %v1102 = vunpack.c.l.b16 %v876
    %v1103 = vunpack.c.l.b16 %v877
    %v1104 = vunpack.c.l.b16 %v878
    %v1105 = vunpack.c.l.b16 %v879
    %v1106 = vunpack.c.l.b16 %v880
    %v1107 = vunpack.c.l.b16 %v881
    %v1108 = vunpack.c.l.b16 %v882
    %v1109 = vunpack.c.l.b16 %v883
    %v1110 = vunpack.c.l.b16 %v884
    %v1111 = vunpack.c.l.b16 %v885
    %v1112 = vpack.c.b16 %v1017, %v1016
    %v1113 = vpack.c.b16 %v1019, %v1018
    %v1114 = vpack.c.b16 %v1021, %v1020
    %v1115 = vpack.c.b16 %v1023, %v1022
    %v1116 = vpack.c.b16 %v1025, %v1024
    %v1117 = vpack.c.b16 %v1027, %v1026
    %v1118 = vpack.c.b16 %v1029, %v1028
    %v1119 = vpack.c.b16 %v1031, %v1030
    %v1120 = vpack.c.b16 %v1033, %v1032
    %v1121 = vpack.c.b16 %v1035, %v1034
    %v1122 = vpack.c.b16 %v1037, %v1036
    %v1123 = vpack.c.b16 %v1039, %v1038
    %v1124 = vpack.c.b16 %v1041, %v1040
    %v1125 = vpack.c.b16 %v1043, %v1042
    %v1126 = vpack.c.b16 %v1045, %v1044
    %v1127 = vpack.c.b16 %v1047, %v1046
    %v1128 = vpack.c.b16 %v1049, %v1048
    %v1129 = vpack.c.b16 %v1051, %v1050
    %v1130 = vpack.c.b16 %v1053, %v1052
    %v1131 = vpack.c.b16 %v1055, %v1054
    %v1132 = vpack.c.b16 %v1057, %v1056
    %v1133 = vpack.c.b16 %v1059, %v1058
    %v1134 = vpack.c.b16 %v1061, %v1060
    %v1135 = vpack.c.b16 %v1063, %v1062
    %v1136 = vpack.c.b16 %v1065, %v1064
    %v1137 = vpack.c.b16 %v1067, %v1066
    %v1138 = vpack.c.b16 %v1069, %v1068
    %v1139 = vpack.c.b16 %v1071, %v1070
    %v1140 = vpack.c.b16 %v1073, %v1072
    %v1141 = vpack.c.b16 %v1075, %v1074
    %v1142 = vpack.c.b16 %v1077, %v1076
    %v1143 = vpack.c.b16 %v1079, %v1078
    %v1144 = vpack.c.b16 %v1081, %v1080
    %v1145 = vpack.c.b16 %v1083, %v1082
    %v1146 = vpack.c.b16 %v1085, %v1084
    %v1147 = vpack.c.b16 %v1087, %v1086
    %v1148 = vpack.c.b16 %v1089, %v1088
    %v1149 = vpack.c.b16 %v1091, %v1090
    %v1150 = vpack.c.b16 %v1093, %v1092
    %v1151 = vpack.c.b16 %v1095, %v1094
    %v1152 = vpack.c.b16 %v1097, %v1096
    %v1153 = vpack.c.b16 %v1099, %v1098
    %v1154 = vpack.c.b16 %v1101, %v1100
    %v1155 = vpack.c.b16 %v1103, %v1102
    %v1156 = vpack.c.b16 %v1105, %v1104
    %v1157 = vpack.c.b16 %v1107, %v1106
    %v1158 = vpack.c.b16 %v1109, %v1108
    %v1159 = vpack.c.b16 %v1111, %v1110
    %1208 = vmatprep.subr.bf16.mxu0 0
    %1209 = vmatpush1.bf16.msra.mxu0 %v1112
    %1210 = vmatprep.subr.bf16.mxu0 0
    %1211 = vmatpush1.bf16.msra.mxu0 %v1113
    %1212 = vmatprep.subr.bf16.mxu0 0
    %1213 = vmatpush1.bf16.msra.mxu0 %v1114
    %1214 = vmatprep.subr.bf16.mxu0 0
    %1215 = vmatpush1.bf16.msra.mxu0 %v1115
    %1216 = vmatprep.subr.bf16.mxu0 0
    %1217 = vmatpush1.bf16.msra.mxu0 %v1116
    %1218 = vmatprep.subr.bf16.mxu0 0
    %1219 = vmatpush1.bf16.msra.mxu0 %v1117
    %1220 = vmatprep.subr.bf16.mxu0 0
    %1221 = vmatpush1.bf16.msra.mxu0 %v1118
    %1222 = vmatprep.subr.bf16.mxu0 0
    %1223 = vmatpush1.bf16.msra.mxu0 %v1119
    %1224 = vmatprep.subr.bf16.mxu0 0
    %1225 = vmatpush1.bf16.msra.mxu0 %v1120
    %1226 = vmatprep.subr.bf16.mxu0 0
    %1227 = vmatpush1.bf16.msra.mxu0 %v1121
    %1228 = vmatprep.subr.bf16.mxu0 0
    %1229 = vmatpush1.bf16.msra.mxu0 %v1122
    %1230 = vmatprep.subr.bf16.mxu0 0
    %1231 = vmatpush1.bf16.msra.mxu0 %v1123
    %1232 = vmatprep.subr.bf16.mxu0 0
    %1233 = vmatpush1.bf16.msra.mxu0 %v1124
    %1234 = vmatprep.subr.bf16.mxu0 0
    %1235 = vmatpush1.bf16.msra.mxu0 %v1125
    %1236 = vmatprep.subr.bf16.mxu0 0
    %1237 = vmatpush1.bf16.msra.mxu0 %v1126
    %1238 = vmatprep.subr.bf16.mxu0 0
    %1239 = vmatpush1.bf16.msra.mxu0 %v1127
    %1240 = vmatprep.mubr.bf16.mxu0 %v909
    %1241 = vmatmul.mubr.bf16.gmra.mrb[0].mxu0 %v908
    %v1242 = vpop.f32.mrb[0].mxu0
    %v1243 = vadd.f32 %v889, %v1242
    %v1244 = vpop.f32.mrb[0].mxu0
    %v1245 = vpop.f32.mrb[0].mxu0
    %v1246 = vadd.f32 %v889, %v1245
    %v1247 = vpop.f32.mrb[0].mxu0
    %1248 = vdwg.mxu0
    %1249 = vmatprep.subr.bf16.mxu0 0
    %1250 = vmatpush1.bf16.msra.mxu0 %v1128
    %1251 = vmatprep.subr.bf16.mxu0 0
    %1252 = vmatpush1.bf16.msra.mxu0 %v1129
    %1253 = vmatprep.subr.bf16.mxu0 0
    %1254 = vmatpush1.bf16.msra.mxu0 %v1130
    %1255 = vmatprep.subr.bf16.mxu0 0
    %1256 = vmatpush1.bf16.msra.mxu0 %v1131
    %1257 = vmatprep.subr.bf16.mxu0 0
    %1258 = vmatpush1.bf16.msra.mxu0 %v1132
    %1259 = vmatprep.subr.bf16.mxu0 0
    %1260 = vmatpush1.bf16.msra.mxu0 %v1133
    %1261 = vmatprep.subr.bf16.mxu0 0
    %1262 = vmatpush1.bf16.msra.mxu0 %v1134
    %1263 = vmatprep.subr.bf16.mxu0 0
    %1264 = vmatpush1.bf16.msra.mxu0 %v1135
    %1265 = vmatprep.subr.bf16.mxu0 0
    %1266 = vmatpush1.bf16.msra.mxu0 %v1136
    %1267 = vmatprep.subr.bf16.mxu0 0
    %1268 = vmatpush1.bf16.msra.mxu0 %v1137
    %1269 = vmatprep.subr.bf16.mxu0 0
    %1270 = vmatpush1.bf16.msra.mxu0 %v1138
    %1271 = vmatprep.subr.bf16.mxu0 0
    %1272 = vmatpush1.bf16.msra.mxu0 %v1139
    %1273 = vmatprep.subr.bf16.mxu0 0
    %1274 = vmatpush1.bf16.msra.mxu0 %v1140
    %1275 = vmatprep.subr.bf16.mxu0 0
    %1276 = vmatpush1.bf16.msra.mxu0 %v1141
    %1277 = vmatprep.subr.bf16.mxu0 0
    %1278 = vmatpush1.bf16.msra.mxu0 %v1142
    %1279 = vmatprep.subr.bf16.mxu0 0
    %1280 = vmatpush1.bf16.msra.mxu0 %v1143
    %1281 = vmatprep.mubr.bf16.mxu0 %v911
    %1282 = vmatmul.mubr.bf16.gmra.mrb[0].mxu0 %v910
    %v1283 = vpop.f32.mrb[0].mxu0
    %v1284 = vadd.f32 %v1243, %v1283
    %v1285 = vpop.f32.mrb[0].mxu0
    %v1286 = vpop.f32.mrb[0].mxu0
    %v1287 = vadd.f32 %v1246, %v1286
    %v1288 = vpop.f32.mrb[0].mxu0
    %1289 = vdwg.mxu0
    %1290 = vmatprep.subr.bf16.mxu0 0
    %1291 = vmatpush1.bf16.msra.mxu0 %v1144
    %1292 = vmatprep.subr.bf16.mxu0 0
    %1293 = vmatpush1.bf16.msra.mxu0 %v1145
    %1294 = vmatprep.subr.bf16.mxu0 0
    %1295 = vmatpush1.bf16.msra.mxu0 %v1146
    %1296 = vmatprep.subr.bf16.mxu0 0
    %1297 = vmatpush1.bf16.msra.mxu0 %v1147
    %1298 = vmatprep.subr.bf16.mxu0 0
    %1299 = vmatpush1.bf16.msra.mxu0 %v1148
    %1300 = vmatprep.subr.bf16.mxu0 0
    %1301 = vmatpush1.bf16.msra.mxu0 %v1149
    %1302 = vmatprep.subr.bf16.mxu0 0
    %1303 = vmatpush1.bf16.msra.mxu0 %v1150
    %1304 = vmatprep.subr.bf16.mxu0 0
    %1305 = vmatpush1.bf16.msra.mxu0 %v1151
    %1306 = vmatprep.subr.bf16.mxu0 0
    %1307 = vmatpush1.bf16.msra.mxu0 %v1152
    %1308 = vmatprep.subr.bf16.mxu0 0
    %1309 = vmatpush1.bf16.msra.mxu0 %v1153
    %1310 = vmatprep.subr.bf16.mxu0 0
    %1311 = vmatpush1.bf16.msra.mxu0 %v1154
    %1312 = vmatprep.subr.bf16.mxu0 0
    %1313 = vmatpush1.bf16.msra.mxu0 %v1155
    %1314 = vmatprep.subr.bf16.mxu0 0
    %1315 = vmatpush1.bf16.msra.mxu0 %v1156
    %1316 = vmatprep.subr.bf16.mxu0 0
    %1317 = vmatpush1.bf16.msra.mxu0 %v1157
    %1318 = vmatprep.subr.bf16.mxu0 0
    %1319 = vmatpush1.bf16.msra.mxu0 %v1158
    %1320 = vmatprep.subr.bf16.mxu0 0
    %1321 = vmatpush1.bf16.msra.mxu0 %v1159
    %1322 = vmatprep.mubr.bf16.mxu0 %v913
    %1323 = vmatmul.mubr.bf16.gmra.mrb[0].mxu0 %v912
    %v1324 = vpop.f32.mrb[0].mxu0
    %v1325 = vadd.f32 %v1284, %v1324
    %v1326 = vpop.f32.mrb[0].mxu0
    %v1327 = vpop.f32.mrb[0].mxu0
    %v1328 = vadd.f32 %v1287, %v1327
    %v1329 = vpop.f32.mrb[0].mxu0
    %1330 = vdwg.mxu0
    %v1331 = vmax.f32 %v1325, 0.0
    %v1332 = vmax.f32 %v1328, 0.0
    %v1333 = vpack.c.bf16 %v783, %v782
    %v1334 = vpack.c.bf16 %v1332, %v1331
    %v1335 = vld [vmem:[%s4] sm:$0xf]
    %v1336 = vld [vmem:[%s4 + $0x4] sm:$0xf]
    %v1337 = vld [vmem:[%s4 + $0x8] sm:$0xf]
    %v1338 = vld [vmem:[%s4 + $0xc] sm:$0xf]
    %v1339 = vld [vmem:[%s4 + $0x10] sm:$0xf]
    %v1340 = vld [vmem:[%s4 + $0x14] sm:$0xf]
    %v1341 = vld [vmem:[%s4 + $0x18] sm:$0xf]
    %v1342 = vld [vmem:[%s4 + $0x1c] sm:$0xf]
    %v1343 = vld [vmem:[%s4 + $0x20] sm:$0xf]
    %v1344 = vld [vmem:[%s4 + $0x24] sm:$0xf]
    %v1345 = vld [vmem:[%s4 + $0x28] sm:$0xf]
    %v1346 = vld [vmem:[%s4 + $0x2c] sm:$0xf]
    %v1347 = vld [vmem:[%s4 + $0x30] sm:$0xf]
    %v1348 = vld [vmem:[%s4 + $0x34] sm:$0xf]
    %v1349 = vld [vmem:[%s4 + $0x38] sm:$0xf]
    %v1350 = vld [vmem:[%s4 + $0x3c] sm:$0xf]
    %v1351 = vld [vmem:[%s4 + $0x40] sm:$0xf]
    %v1352 = vld [vmem:[%s4 + $0x44] sm:$0xf]
    %v1353 = vld [vmem:[%s4 + $0x48] sm:$0xf]
    %v1354 = vld [vmem:[%s4 + $0x4c] sm:$0xf]
    %v1355 = vld [vmem:[%s4 + $0x50] sm:$0xf]
    %v1356 = vld [vmem:[%s4 + $0x54] sm:$0xf]
    %v1357 = vld [vmem:[%s4 + $0x58] sm:$0xf]
    %v1358 = vld [vmem:[%s4 + $0x5c] sm:$0xf]
    %v1359 = vld [vmem:[%s4 + $0x60] sm:$0xf]
    %v1360 = vld [vmem:[%s4 + $0x64] sm:$0xf]
    %v1361 = vld [vmem:[%s4 + $0x68] sm:$0xf]
    %v1362 = vld [vmem:[%s4 + $0x6c] sm:$0xf]
    %v1363 = vld [vmem:[%s4 + $0x70] sm:$0xf]
    %v1364 = vld [vmem:[%s4 + $0x74] sm:$0xf]
    %v1365 = vld [vmem:[%s4 + $0x78] sm:$0xf]
    %v1366 = vld [vmem:[%s4 + $0x7c] sm:$0xf]
    %v1399 = vunpack.c.l.b16 %v1335
    %v1400 = vunpack.c.l.b16 %v1336
    %v1401 = vunpack.c.l.b16 %v1337
    %v1402 = vunpack.c.l.b16 %v1338
    %v1403 = vunpack.c.l.b16 %v1339
    %v1404 = vunpack.c.l.b16 %v1340
    %v1405 = vunpack.c.l.b16 %v1341
    %v1406 = vunpack.c.l.b16 %v1342
    %v1407 = vunpack.c.l.b16 %v1343
    %v1408 = vunpack.c.l.b16 %v1344
    %v1409 = vunpack.c.l.b16 %v1345
    %v1410 = vunpack.c.l.b16 %v1346
    %v1411 = vunpack.c.l.b16 %v1347
    %v1412 = vunpack.c.l.b16 %v1348
    %v1413 = vunpack.c.l.b16 %v1349
    %v1414 = vunpack.c.l.b16 %v1350
    %v1415 = vunpack.c.l.b16 %v1351
    %v1416 = vunpack.c.l.b16 %v1352
    %v1417 = vunpack.c.l.b16 %v1353
    %v1418 = vunpack.c.l.b16 %v1354
    %v1419 = vunpack.c.l.b16 %v1355
    %v1420 = vunpack.c.l.b16 %v1356
    %v1421 = vunpack.c.l.b16 %v1357
    %v1422 = vunpack.c.l.b16 %v1358
    %v1423 = vunpack.c.l.b16 %v1359
    %v1424 = vunpack.c.l.b16 %v1360
    %v1425 = vunpack.c.l.b16 %v1361
    %v1426 = vunpack.c.l.b16 %v1362
    %v1427 = vunpack.c.l.b16 %v1363
    %v1428 = vunpack.c.l.b16 %v1364
    %v1429 = vunpack.c.l.b16 %v1365
    %v1430 = vunpack.c.l.b16 %v1366
    %v1431 = vpack.c.b16 %v1400, %v1399
    %v1432 = vpack.c.b16 %v1402, %v1401
    %v1433 = vpack.c.b16 %v1404, %v1403
    %v1434 = vpack.c.b16 %v1406, %v1405
    %v1435 = vpack.c.b16 %v1408, %v1407
    %v1436 = vpack.c.b16 %v1410, %v1409
    %v1437 = vpack.c.b16 %v1412, %v1411
    %v1438 = vpack.c.b16 %v1414, %v1413
    %v1439 = vpack.c.b16 %v1416, %v1415
    %v1440 = vpack.c.b16 %v1418, %v1417
    %v1441 = vpack.c.b16 %v1420, %v1419
    %v1442 = vpack.c.b16 %v1422, %v1421
    %v1443 = vpack.c.b16 %v1424, %v1423
    %v1444 = vpack.c.b16 %v1426, %v1425
    %v1445 = vpack.c.b16 %v1428, %v1427
    %v1446 = vpack.c.b16 %v1430, %v1429
    %1463 = vmatprep.subr.bf16.mxu0 0
    %1464 = vmatpush1.bf16.msra.mxu0 %v1431
    %1465 = vmatprep.subr.bf16.mxu0 0
    %1466 = vmatpush1.bf16.msra.mxu0 %v1432
    %1467 = vmatprep.subr.bf16.mxu0 0
    %1468 = vmatpush1.bf16.msra.mxu0 %v1433
    %1469 = vmatprep.subr.bf16.mxu0 0
    %1470 = vmatpush1.bf16.msra.mxu0 %v1434
    %1471 = vmatprep.subr.bf16.mxu0 0
    %1472 = vmatpush1.bf16.msra.mxu0 %v1435
    %1473 = vmatprep.subr.bf16.mxu0 0
    %1474 = vmatpush1.bf16.msra.mxu0 %v1436
    %1475 = vmatprep.subr.bf16.mxu0 0
    %1476 = vmatpush1.bf16.msra.mxu0 %v1437
    %1477 = vmatprep.subr.bf16.mxu0 0
    %1478 = vmatpush1.bf16.msra.mxu0 %v1438
    %1479 = vmatprep.subr.bf16.mxu0 0
    %1480 = vmatpush1.bf16.msra.mxu0 %v1439
    %1481 = vmatprep.subr.bf16.mxu0 0
    %1482 = vmatpush1.bf16.msra.mxu0 %v1440
    %1483 = vmatprep.subr.bf16.mxu0 0
    %1484 = vmatpush1.bf16.msra.mxu0 %v1441
    %1485 = vmatprep.subr.bf16.mxu0 0
    %1486 = vmatpush1.bf16.msra.mxu0 %v1442
    %1487 = vmatprep.subr.bf16.mxu0 0
    %1488 = vmatpush1.bf16.msra.mxu0 %v1443
    %1489 = vmatprep.subr.bf16.mxu0 0
    %1490 = vmatpush1.bf16.msra.mxu0 %v1444
    %1491 = vmatprep.subr.bf16.mxu0 0
    %1492 = vmatpush1.bf16.msra.mxu0 %v1445
    %1493 = vmatprep.subr.bf16.mxu0 0
    %1494 = vmatpush1.bf16.msra.mxu0 %v1446
    %1495 = vmatprep.mubr.bf16.mxu0 %v1334
    %1496 = vmatmul.mubr.bf16.gmra.mrb[0].mxu0 %v1333
    %v1497 = vpop.f32.mrb[0].mxu0
    %v1498 = vadd.f32 0.0, %v1497
    %v1499 = vpop.f32.mrb[0].mxu0
    %v1500 = vpop.f32.mrb[0].mxu0
    %v1501 = vadd.f32 0.0, %v1500
    %v1502 = vpop.f32.mrb[0].mxu0
    %1503 = vdwg.mxu0
    %v1504 = vlaneseq
    %v1505 = vshrl.u32 %v1504, 7
    %v1506 = vsub.s32 2, %v1505
    %v1507 = vrot.slane %v53, %v1506
    %v1508 = vadd.f32 %v1498, %v1507
    %v1509 = vadd.f32 %v1501, %v1507
    %1512 = vrot.lane.b32.xlu0 %v1498, 125
    %v1513 = vpop.permute.xlu0 %1512
    %1514 = vrot.lane.b32.xlu0 %v1501, 125
    %v1515 = vpop.permute.xlu0 %1514
    %v1518 = vmul.f32 %v1508, %v1513
    %v1519 = vmul.f32 %v1509, %v1515
    %1521 = vrot.lane.b32.xlu0 %v1507, 3
    %v1522 = vpop.permute.xlu0 %1521
    %v1524 = vadd.f32 %v1498, %v1522
    %v1525 = vadd.f32 %v1501, %v1522
    %v1526 = vmul.f32 %v1524, %v1513
    %v1527 = vmul.f32 %v1525, %v1515
    %1530 = vrot.lane.b32.xlu0 %v1526, 122
    %v1531 = vpop.permute.xlu0 %1530
    %1532 = vrot.lane.b32.xlu0 %v1527, 122
    %v1533 = vpop.permute.xlu0 %1532
    %v1536 = vadd.f32 %v1518, %v1531
    %v1537 = vadd.f32 %v1519, %v1533
    %1538 = vrot.lane.b32.xlu0 %v1507, 122
    %v1539 = vpop.permute.xlu0 %1538
    %v1541 = vadd.f32 %v1536, %v1539
    %v1542 = vadd.f32 %v1537, %v1539
    %v1543 = vlaneseq
    %v1544 = vand.u32 %v1543, 127
    %vm1545 = vcmp.eq.s32.totalorder %v1544, 0
    %vm1546 = vcmp.eq.s32.totalorder %v1544, 1
    %vm1547 = vcmp.eq.s32.totalorder %v1544, 2
    %1549 = vset.pattern.permute.xlu0 2
    %1550 = vperm.xlu0 %1549, %v1541
    %v1551 = vpop.permute.xlu0 %1550
    %1554 = vset.pattern.permute.xlu0 2
    %1555 = vperm.xlu0 %1554, %v1542
    %v1556 = vpop.permute.xlu0 %1555
    %v1558 = vsel %vm1547, %v1551, 0.0
    %v1559 = vsel %vm1547, %v1556, 0.0
    %1560 = vset.pattern.permute.xlu0 1
    %1561 = vperm.xlu0 %1560, %v1541
    %v1562 = vpop.permute.xlu0 %1561
    %1564 = vset.pattern.permute.xlu0 1
    %1565 = vperm.xlu0 %1564, %v1542
    %v1566 = vpop.permute.xlu0 %1565
    %v1568 = vsel %vm1546, %v1562, %v1558
    %v1569 = vsel %vm1546, %v1566, %v1559
    %1570 = vset.pattern.permute.xlu0 0
    %1571 = vperm.xlu0 %1570, %v1541
    %v1572 = vpop.permute.xlu0 %1571
    %1574 = vset.pattern.permute.xlu0 0
    %1575 = vperm.xlu0 %1574, %v1542
    %v1576 = vpop.permute.xlu0 %1575
    %v1578 = vsel %vm1545, %v1572, %v1568
    %v1579 = vsel %vm1545, %v1576, %v1569
    %1580 = vst [vmem:[#allocation7] sm:$0xff] %v1578
    %1581 = vst [vmem:[#allocation7 + $0x8] sm:$0xff] %v1579
    // Predicated region
    $region34: #{tpu_custom_call.1} parent=1 // pred_check
      _
    $region35: #{tpu_custom_call.1} parent=1 // pred_check_branch
      %1583 = sbr.rel (0) target = $region37
    $region36: #{tpu_custom_call.1} parent=1 // pred_region
      %s1585 = ssub.s32 256, 256
      %1586 = vsyncadd [#allocation4], %s1585
      %s1587 = sshll.u32 [#allocation7], 4
      %s1588 = int_to_ptr.vmem [resolvable:$true] %s1587
      %1593 = dma.vmem_to_hbm [thread:$0]  %s1588, 256, %s6, [#allocation4], 128, 128, 8
    $region37: #{tpu_custom_call.1} parent=1 // pred_fallthru
      _
    // Predicated region
    $region38: #{tpu_custom_call.1} parent=1 // pred_check
      _
    $region39: #{tpu_custom_call.1} parent=1 // pred_check_branch
      %1595 = sbr.rel (0) target = $region41
    $region40: #{tpu_custom_call.1} parent=1 // pred_region
      %1596 = dma.done [#allocation4], 256
    $region41: #{tpu_custom_call.1} parent=1 // pred_fallthru
      _
    %1597 = vsyncpa [#allocation3], 1
    %1598 = vsyncpa [#allocation6], 1
    %1599 = vsyncpa [#allocation4], 1

// kernel: tpu_custom_call.1
$region0: #{tpu_custom_call.1}
  #allocation0 [shape = 'u32[]', space=smem, size = 0x4, offset = 0x4, fixed_abs, tag = 'smem constant byte address 0x4 - core index']
  #allocation1 [shape = 'u32[144,128]{1,0:T(1,128)}', space=vmem, size = 0x12000, scoped, tag = 'internal scratch']
  %s0 = inlined_call_operand.vmem [shape: bf16[16,768], index: 0, kind: input, shape index: {}]
  %s1 = inlined_call_operand.vmem [shape: bf16[16,1024], index: 1, kind: input, shape index: {}]
  %s2 = inlined_call_operand.hbm [shape: bf16[768,128], index: 2, kind: input, shape index: {}]
  %s3 = inlined_call_operand.hbm [shape: bf16[1024,128], index: 3, kind: input, shape index: {}]
  %s4 = inlined_call_operand.vmem [shape: bf16[256,16], index: 4, kind: input, shape index: {}]
  %s5 = inlined_call_operand.vmem [shape: f32[3,128], index: 5, kind: input, shape index: {}]
  %s6 = inlined_call_operand.hbm [shape: f32[16,128], index: 6, kind: output, shape index: {}]
  %s7 = sld [smem:[#allocation0]]
  $region42: #{tpu_custom_call.1} parent=0
    _
  %s9 = ssub.s32 1, %s7
  %s10 = scalar_select 0, %s9, %s7
  $region1: #{tpu_custom_call.1} parent=0
    #allocation2 [shape = 'u8[196608]{0}', space=vmem, size = 0x30000, scoped, tag = 'input window, operand 2, single buffered']
    #allocation3 [shape = 's32[1]{0}', space=sflag, size = 0x4, scoped, tag = 'scoped memory for tpu_custom_call.1']
    #allocation4 [shape = 's32[1]{0}', space=sflag, size = 0x4, scoped, tag = 'scoped memory for tpu_custom_call.1']
    #allocation5 [shape = 'u8[262144]{0}', space=vmem, size = 0x40000, scoped, tag = 'input window, operand 3, single buffered']
    #allocation6 [shape = 's32[1]{0}', space=sflag, size = 0x4, scoped, tag = 'scoped memory for tpu_custom_call.1']
    #allocation7 [shape = 'u8[8192]{0}', space=vmem, size = 0x2000, scoped, tag = 'output window, operand 0, single buffered']
    %11 = vsyncpa [#allocation3], 0
    %12 = vsyncpa [#allocation6], 0
    %13 = vsyncpa [#allocation4], 0
    // Predicated region
    $region2: #{tpu_custom_call.1} parent=1 // pred_check
      _
    $region3: #{tpu_custom_call.1} parent=1 // pred_check_branch
      %15 = sbr.rel (0) target = $region5
    $region4: #{tpu_custom_call.1} parent=1 // pred_region
      _
    $region5: #{tpu_custom_call.1} parent=1 // pred_fallthru
      _
    // Predicated region
    $region6: #{tpu_custom_call.1} parent=1 // pred_check
      _
    $region7: #{tpu_custom_call.1} parent=1 // pred_check_branch
      %17 = sbr.rel (0) target = $region9
    $region8: #{tpu_custom_call.1} parent=1 // pred_region
      _
    $region9: #{tpu_custom_call.1} parent=1 // pred_fallthru
      _
    // Predicated region
    $region10: #{tpu_custom_call.1} parent=1 // pred_check
      _
    $region11: #{tpu_custom_call.1} parent=1 // pred_check_branch
      %19 = sbr.rel (0) target = $region13
    $region12: #{tpu_custom_call.1} parent=1 // pred_region
      %s21 = ssub.s32 6144, 6144
      %22 = vsyncadd [#allocation3], %s21
      %s23 = sshll.u32 [#allocation2], 4
      %s24 = int_to_ptr.vmem [resolvable:$true] %s23
      %29 = dma.hbm_to_vmem [thread:$0]  %s2, 6144, %s24, [#allocation3], 64, 64, 4
    $region13: #{tpu_custom_call.1} parent=1 // pred_fallthru
      _
    // Predicated region
    $region14: #{tpu_custom_call.1} parent=1 // pred_check
      _
    $region15: #{tpu_custom_call.1} parent=1 // pred_check_branch
      %31 = sbr.rel (0) target = $region17
    $region16: #{tpu_custom_call.1} parent=1 // pred_region
      %s33 = ssub.s32 8192, 8192
      %34 = vsyncadd [#allocation6], %s33
      %s35 = sshll.u32 [#allocation5], 4
      %s36 = int_to_ptr.vmem [resolvable:$true] %s35
      %41 = dma.hbm_to_vmem [thread:$0]  %s3, 8192, %s36, [#allocation6], 64, 64, 4
    $region17: #{tpu_custom_call.1} parent=1 // pred_fallthru
      _
    // Predicated region
    $region18: #{tpu_custom_call.1} parent=1 // pred_check
      _
    $region19: #{tpu_custom_call.1} parent=1 // pred_check_branch
      %43 = sbr.rel (0) target = $region21
    $region20: #{tpu_custom_call.1} parent=1 // pred_region
      _
    $region21: #{tpu_custom_call.1} parent=1 // pred_fallthru
      _
    // Predicated region
    $region22: #{tpu_custom_call.1} parent=1 // pred_check
      _
    $region23: #{tpu_custom_call.1} parent=1 // pred_check_branch
      %45 = sbr.rel (0) target = $region25
    $region24: #{tpu_custom_call.1} parent=1 // pred_region
      _
    $region25: #{tpu_custom_call.1} parent=1 // pred_fallthru
      _
    // Predicated region
    $region26: #{tpu_custom_call.1} parent=1 // pred_check
      _
    $region27: #{tpu_custom_call.1} parent=1 // pred_check_branch
      %47 = sbr.rel (0) target = $region29
    $region28: #{tpu_custom_call.1} parent=1 // pred_region
      %48 = dma.done [#allocation3], 6144
    $region29: #{tpu_custom_call.1} parent=1 // pred_fallthru
      _
    // Predicated region
    $region30: #{tpu_custom_call.1} parent=1 // pred_check
      _
    $region31: #{tpu_custom_call.1} parent=1 // pred_check_branch
      %50 = sbr.rel (0) target = $region33
    $region32: #{tpu_custom_call.1} parent=1 // pred_region
      %51 = dma.done [#allocation6], 8192
    $region33: #{tpu_custom_call.1} parent=1 // pred_fallthru
      _
    %v53 = vld [vmem:[%s5] sm:$0x7]
    %v54 = vld [vmem:[%s1] sm:$0xff]
    %v55 = vld [vmem:[%s1 + $0x8] sm:$0xff]
    %v56 = vld [vmem:[%s1 + $0x10] sm:$0xff]
    %v57 = vld [vmem:[%s1 + $0x18] sm:$0xff]
    %v58 = vld [vmem:[%s1 + $0x20] sm:$0xff]
    %v59 = vld [vmem:[%s1 + $0x28] sm:$0xff]
    %v60 = vld [vmem:[%s1 + $0x30] sm:$0xff]
    %v61 = vld [vmem:[%s1 + $0x38] sm:$0xff]
    %v62 = vld [vmem:[#allocation5] sm:$0xf]
    %v63 = vld [vmem:[#allocation5 + $0x4] sm:$0xf]
    %v64 = vld [vmem:[#allocation5 + $0x8] sm:$0xf]
    %v65 = vld [vmem:[#allocation5 + $0xc] sm:$0xf]
    %v66 = vld [vmem:[#allocation5 + $0x10] sm:$0xf]
    %v67 = vld [vmem:[#allocation5 + $0x14] sm:$0xf]
    %v68 = vld [vmem:[#allocation5 + $0x18] sm:$0xf]
    %v69 = vld [vmem:[#allocation5 + $0x1c] sm:$0xf]
    %v70 = vld [vmem:[#allocation5 + $0x20] sm:$0xf]
    %v71 = vld [vmem:[#allocation5 + $0x24] sm:$0xf]
    %v72 = vld [vmem:[#allocation5 + $0x28] sm:$0xf]
    %v73 = vld [vmem:[#allocation5 + $0x2c] sm:$0xf]
    %v74 = vld [vmem:[#allocation5 + $0x30] sm:$0xf]
    %v75 = vld [vmem:[#allocation5 + $0x34] sm:$0xf]
    %v76 = vld [vmem:[#allocation5 + $0x38] sm:$0xf]
    %v77 = vld [vmem:[#allocation5 + $0x3c] sm:$0xf]
    %v78 = vld [vmem:[#allocation5 + $0x40] sm:$0xf]
    %v79 = vld [vmem:[#allocation5 + $0x44] sm:$0xf]
    %v80 = vld [vmem:[#allocation5 + $0x48] sm:$0xf]
    %v81 = vld [vmem:[#allocation5 + $0x4c] sm:$0xf]
    %v82 = vld [vmem:[#allocation5 + $0x50] sm:$0xf]
    %v83 = vld [vmem:[#allocation5 + $0x54] sm:$0xf]
    %v84 = vld [vmem:[#allocation5 + $0x58] sm:$0xf]
    %v85 = vld [vmem:[#allocation5 + $0x5c] sm:$0xf]
    %v86 = vld [vmem:[#allocation5 + $0x60] sm:$0xf]
    %v87 = vld [vmem:[#allocation5 + $0x64] sm:$0xf]
    %v88 = vld [vmem:[#allocation5 + $0x68] sm:$0xf]
    %v89 = vld [vmem:[#allocation5 + $0x6c] sm:$0xf]
    %v90 = vld [vmem:[#allocation5 + $0x70] sm:$0xf]
    %v91 = vld [vmem:[#allocation5 + $0x74] sm:$0xf]
    %v92 = vld [vmem:[#allocation5 + $0x78] sm:$0xf]
    %v93 = vld [vmem:[#allocation5 + $0x7c] sm:$0xf]
    %v94 = vld [vmem:[#allocation5 + $0x80] sm:$0xf]
    %v95 = vld [vmem:[#allocation5 + $0x84] sm:$0xf]
    %v96 = vld [vmem:[#allocation5 + $0x88] sm:$0xf]
    %v97 = vld [vmem:[#allocation5 + $0x8c] sm:$0xf]
    %v98 = vld [vmem:[#allocation5 + $0x90] sm:$0xf]
    %v99 = vld [vmem:[#allocation5 + $0x94] sm:$0xf]
    %v100 = vld [vmem:[#allocation5 + $0x98] sm:$0xf]
    %v101 = vld [vmem:[#allocation5 + $0x9c] sm:$0xf]
    %v102 = vld [vmem:[#allocation5 + $0xa0] sm:$0xf]
    %v103 = vld [vmem:[#allocation5 + $0xa4] sm:$0xf]
    %v104 = vld [vmem:[#allocation5 + $0xa8] sm:$0xf]
    %v105 = vld [vmem:[#allocation5 + $0xac] sm:$0xf]
    %v106 = vld [vmem:[#allocation5 + $0xb0] sm:$0xf]
    %v107 = vld [vmem:[#allocation5 + $0xb4] sm:$0xf]
    %v108 = vld [vmem:[#allocation5 + $0xb8] sm:$0xf]
    %v109 = vld [vmem:[#allocation5 + $0xbc] sm:$0xf]
    %v110 = vld [vmem:[#allocation5 + $0xc0] sm:$0xf]
    %v111 = vld [vmem:[#allocation5 + $0xc4] sm:$0xf]
    %v112 = vld [vmem:[#allocation5 + $0xc8] sm:$0xf]
    %v113 = vld [vmem:[#allocation5 + $0xcc] sm:$0xf]
    %v114 = vld [vmem:[#allocation5 + $0xd0] sm:$0xf]
    %v115 = vld [vmem:[#allocation5 + $0xd4] sm:$0xf]
    %v116 = vld [vmem:[#allocation5 + $0xd8] sm:$0xf]
    %v117 = vld [vmem:[#allocation5 + $0xdc] sm:$0xf]
    %v118 = vld [vmem:[#allocation5 + $0xe0] sm:$0xf]
    %v119 = vld [vmem:[#allocation5 + $0xe4] sm:$0xf]
    %v120 = vld [vmem:[#allocation5 + $0xe8] sm:$0xf]
    %v121 = vld [vmem:[#allocation5 + $0xec] sm:$0xf]
    %v122 = vld [vmem:[#allocation5 + $0xf0] sm:$0xf]
    %v123 = vld [vmem:[#allocation5 + $0xf4] sm:$0xf]
    %v124 = vld [vmem:[#allocation5 + $0xf8] sm:$0xf]
    %v125 = vld [vmem:[#allocation5 + $0xfc] sm:$0xf]
    %v126 = vld [vmem:[#allocation5 + $0x100] sm:$0xf]
    %v127 = vld [vmem:[#allocation5 + $0x104] sm:$0xf]
    %v128 = vld [vmem:[#allocation5 + $0x108] sm:$0xf]
    %v129 = vld [vmem:[#allocation5 + $0x10c] sm:$0xf]
    %v130 = vld [vmem:[#allocation5 + $0x110] sm:$0xf]
    %v131 = vld [vmem:[#allocation5 + $0x114] sm:$0xf]
    %v132 = vld [vmem:[#allocation5 + $0x118] sm:$0xf]
    %v133 = vld [vmem:[#allocation5 + $0x11c] sm:$0xf]
    %v134 = vld [vmem:[#allocation5 + $0x120] sm:$0xf]
    %v135 = vld [vmem:[#allocation5 + $0x124] sm:$0xf]
    %v136 = vld [vmem:[#allocation5 + $0x128] sm:$0xf]
    %v137 = vld [vmem:[#allocation5 + $0x12c] sm:$0xf]
    %v138 = vld [vmem:[#allocation5 + $0x130] sm:$0xf]
    %v139 = vld [vmem:[#allocation5 + $0x134] sm:$0xf]
    %v140 = vld [vmem:[#allocation5 + $0x138] sm:$0xf]
    %v141 = vld [vmem:[#allocation5 + $0x13c] sm:$0xf]
    %v142 = vld [vmem:[#allocation5 + $0x140] sm:$0xf]
    %v143 = vld [vmem:[#allocation5 + $0x144] sm:$0xf]
    %v144 = vld [vmem:[#allocation5 + $0x148] sm:$0xf]
    %v145 = vld [vmem:[#allocation5 + $0x14c] sm:$0xf]
    %v146 = vld [vmem:[#allocation5 + $0x150] sm:$0xf]
    %v147 = vld [vmem:[#allocation5 + $0x154] sm:$0xf]
    %v148 = vld [vmem:[#allocation5 + $0x158] sm:$0xf]
    %v149 = vld [vmem:[#allocation5 + $0x15c] sm:$0xf]
    %v150 = vld [vmem:[#allocation5 + $0x160] sm:$0xf]
    %v151 = vld [vmem:[#allocation5 + $0x164] sm:$0xf]
    %v152 = vld [vmem:[#allocation5 + $0x168] sm:$0xf]
    %v153 = vld [vmem:[#allocation5 + $0x16c] sm:$0xf]
    %v154 = vld [vmem:[#allocation5 + $0x170] sm:$0xf]
    %v155 = vld [vmem:[#allocation5 + $0x174] sm:$0xf]
    %v156 = vld [vmem:[#allocation5 + $0x178] sm:$0xf]
    %v157 = vld [vmem:[#allocation5 + $0x17c] sm:$0xf]
    %v158 = vld [vmem:[#allocation5 + $0x180] sm:$0xf]
    %v159 = vld [vmem:[#allocation5 + $0x184] sm:$0xf]
    %v160 = vld [vmem:[#allocation5 + $0x188] sm:$0xf]
    %v161 = vld [vmem:[#allocation5 + $0x18c] sm:$0xf]
    %v162 = vld [vmem:[#allocation5 + $0x190] sm:$0xf]
    %v163 = vld [vmem:[#allocation5 + $0x194] sm:$0xf]
    %v164 = vld [vmem:[#allocation5 + $0x198] sm:$0xf]
    %v165 = vld [vmem:[#allocation5 + $0x19c] sm:$0xf]
    %v166 = vld [vmem:[#allocation5 + $0x1a0] sm:$0xf]
    %v167 = vld [vmem:[#allocation5 + $0x1a4] sm:$0xf]
    %v168 = vld [vmem:[#allocation5 + $0x1a8] sm:$0xf]
    %v169 = vld [vmem:[#allocation5 + $0x1ac] sm:$0xf]
    %v170 = vld [vmem:[#allocation5 + $0x1b0] sm:$0xf]
    %v171 = vld [vmem:[#allocation5 + $0x1b4] sm:$0xf]
    %v172 = vld [vmem:[#allocation5 + $0x1b8] sm:$0xf]
    %v173 = vld [vmem:[#allocation5 + $0x1bc] sm:$0xf]
    %v174 = vld [vmem:[#allocation5 + $0x1c0] sm:$0xf]
    %v175 = vld [vmem:[#allocation5 + $0x1c4] sm:$0xf]
    %v176 = vld [vmem:[#allocation5 + $0x1c8] sm:$0xf]
    %v177 = vld [vmem:[#allocation5 + $0x1cc] sm:$0xf]
    %v178 = vld [vmem:[#allocation5 + $0x1d0] sm:$0xf]
    %v179 = vld [vmem:[#allocation5 + $0x1d4] sm:$0xf]
    %v180 = vld [vmem:[#allocation5 + $0x1d8] sm:$0xf]
    %v181 = vld [vmem:[#allocation5 + $0x1dc] sm:$0xf]
    %v182 = vld [vmem:[#allocation5 + $0x1e0] sm:$0xf]
    %v183 = vld [vmem:[#allocation5 + $0x1e4] sm:$0xf]
    %v184 = vld [vmem:[#allocation5 + $0x1e8] sm:$0xf]
    %v185 = vld [vmem:[#allocation5 + $0x1ec] sm:$0xf]
    %v186 = vld [vmem:[#allocation5 + $0x1f0] sm:$0xf]
    %v187 = vld [vmem:[#allocation5 + $0x1f4] sm:$0xf]
    %v188 = vld [vmem:[#allocation5 + $0x1f8] sm:$0xf]
    %v189 = vld [vmem:[#allocation5 + $0x1fc] sm:$0xf]
    %v190 = vlaneseq
    %v191 = vshrl.u32 %v190, 7
    %v192 = vsub.s32 1, %v191
    %v193 = vrot.slane %v53, %v192
    %v202 = vunpack.c.l.b16 %v54
    %v203 = vunpack.c.h.b16 %v54
    %v204 = vunpack.c.l.b16 %v55
    %v205 = vunpack.c.h.b16 %v55
    %v206 = vunpack.c.l.b16 %v56
    %v207 = vunpack.c.h.b16 %v56
    %v208 = vunpack.c.l.b16 %v57
    %v209 = vunpack.c.h.b16 %v57
    %v210 = vunpack.c.l.b16 %v58
    %v211 = vunpack.c.h.b16 %v58
    %v212 = vunpack.c.l.b16 %v59
    %v213 = vunpack.c.h.b16 %v59
    %v214 = vunpack.c.l.b16 %v60
    %v215 = vunpack.c.h.b16 %v60
    %v216 = vunpack.c.l.b16 %v61
    %v217 = vunpack.c.h.b16 %v61
    %v218 = vpack.c.b16 %v210, %v202
    %v219 = vpack.c.b16 %v211, %v203
    %v220 = vpack.c.b16 %v212, %v204
    %v221 = vpack.c.b16 %v213, %v205
    %v222 = vpack.c.b16 %v214, %v206
    %v223 = vpack.c.b16 %v215, %v207
    %v224 = vpack.c.b16 %v216, %v208
    %v225 = vpack.c.b16 %v217, %v209
    %v362 = vunpack.c.l.b16 %v62
    %v363 = vunpack.c.l.b16 %v63
    %v364 = vunpack.c.l.b16 %v64
    %v365 = vunpack.c.l.b16 %v65
    %v366 = vunpack.c.l.b16 %v66
    %v367 = vunpack.c.l.b16 %v67
    %v368 = vunpack.c.l.b16 %v68
    %v369 = vunpack.c.l.b16 %v69
    %v370 = vunpack.c.l.b16 %v70
    %v371 = vunpack.c.l.b16 %v71
    %v372 = vunpack.c.l.b16 %v72
    %v373 = vunpack.c.l.b16 %v73
    %v374 = vunpack.c.l.b16 %v74
    %v375 = vunpack.c.l.b16 %v75
    %v376 = vunpack.c.l.b16 %v76
    %v377 = vunpack.c.l.b16 %v77
    %v378 = vunpack.c.l.b16 %v78
    %v379 = vunpack.c.l.b16 %v79
    %v380 = vunpack.c.l.b16 %v80
    %v381 = vunpack.c.l.b16 %v81
    %v382 = vunpack.c.l.b16 %v82
    %v383 = vunpack.c.l.b16 %v83
    %v384 = vunpack.c.l.b16 %v84
    %v385 = vunpack.c.l.b16 %v85
    %v386 = vunpack.c.l.b16 %v86
    %v387 = vunpack.c.l.b16 %v87
    %v388 = vunpack.c.l.b16 %v88
    %v389 = vunpack.c.l.b16 %v89
    %v390 = vunpack.c.l.b16 %v90
    %v391 = vunpack.c.l.b16 %v91
    %v392 = vunpack.c.l.b16 %v92
    %v393 = vunpack.c.l.b16 %v93
    %v394 = vunpack.c.l.b16 %v94
    %v395 = vunpack.c.l.b16 %v95
    %v396 = vunpack.c.l.b16 %v96
    %v397 = vunpack.c.l.b16 %v97
    %v398 = vunpack.c.l.b16 %v98
    %v399 = vunpack.c.l.b16 %v99
    %v400 = vunpack.c.l.b16 %v100
    %v401 = vunpack.c.l.b16 %v101
    %v402 = vunpack.c.l.b16 %v102
    %v403 = vunpack.c.l.b16 %v103
    %v404 = vunpack.c.l.b16 %v104
    %v405 = vunpack.c.l.b16 %v105
    %v406 = vunpack.c.l.b16 %v106
    %v407 = vunpack.c.l.b16 %v107
    %v408 = vunpack.c.l.b16 %v108
    %v409 = vunpack.c.l.b16 %v109
    %v410 = vunpack.c.l.b16 %v110
    %v411 = vunpack.c.l.b16 %v111
    %v412 = vunpack.c.l.b16 %v112
    %v413 = vunpack.c.l.b16 %v113
    %v414 = vunpack.c.l.b16 %v114
    %v415 = vunpack.c.l.b16 %v115
    %v416 = vunpack.c.l.b16 %v116
    %v417 = vunpack.c.l.b16 %v117
    %v418 = vunpack.c.l.b16 %v118
    %v419 = vunpack.c.l.b16 %v119
    %v420 = vunpack.c.l.b16 %v120
    %v421 = vunpack.c.l.b16 %v121
    %v422 = vunpack.c.l.b16 %v122
    %v423 = vunpack.c.l.b16 %v123
    %v424 = vunpack.c.l.b16 %v124
    %v425 = vunpack.c.l.b16 %v125
    %v426 = vunpack.c.l.b16 %v126
    %v427 = vunpack.c.l.b16 %v127
    %v428 = vunpack.c.l.b16 %v128
    %v429 = vunpack.c.l.b16 %v129
    %v430 = vunpack.c.l.b16 %v130
    %v431 = vunpack.c.l.b16 %v131
    %v432 = vunpack.c.l.b16 %v132
    %v433 = vunpack.c.l.b16 %v133
    %v434 = vunpack.c.l.b16 %v134
    %v435 = vunpack.c.l.b16 %v135
    %v436 = vunpack.c.l.b16 %v136
    %v437 = vunpack.c.l.b16 %v137
    %v438 = vunpack.c.l.b16 %v138
    %v439 = vunpack.c.l.b16 %v139
    %v440 = vunpack.c.l.b16 %v140
    %v441 = vunpack.c.l.b16 %v141
    %v442 = vunpack.c.l.b16 %v142
    %v443 = vunpack.c.l.b16 %v143
    %v444 = vunpack.c.l.b16 %v144
    %v445 = vunpack.c.l.b16 %v145
    %v446 = vunpack.c.l.b16 %v146
    %v447 = vunpack.c.l.b16 %v147
    %v448 = vunpack.c.l.b16 %v148
    %v449 = vunpack.c.l.b16 %v149
    %v450 = vunpack.c.l.b16 %v150
    %v451 = vunpack.c.l.b16 %v151
    %v452 = vunpack.c.l.b16 %v152
    %v453 = vunpack.c.l.b16 %v153
    %v454 = vunpack.c.l.b16 %v154
    %v455 = vunpack.c.l.b16 %v155
    %v456 = vunpack.c.l.b16 %v156
    %v457 = vunpack.c.l.b16 %v157
    %v458 = vunpack.c.l.b16 %v158
    %v459 = vunpack.c.l.b16 %v159
    %v460 = vunpack.c.l.b16 %v160
    %v461 = vunpack.c.l.b16 %v161
    %v462 = vunpack.c.l.b16 %v162
    %v463 = vunpack.c.l.b16 %v163
    %v464 = vunpack.c.l.b16 %v164
    %v465 = vunpack.c.l.b16 %v165
    %v466 = vunpack.c.l.b16 %v166
    %v467 = vunpack.c.l.b16 %v167
    %v468 = vunpack.c.l.b16 %v168
    %v469 = vunpack.c.l.b16 %v169
    %v470 = vunpack.c.l.b16 %v170
    %v471 = vunpack.c.l.b16 %v171
    %v472 = vunpack.c.l.b16 %v172
    %v473 = vunpack.c.l.b16 %v173
    %v474 = vunpack.c.l.b16 %v174
    %v475 = vunpack.c.l.b16 %v175
    %v476 = vunpack.c.l.b16 %v176
    %v477 = vunpack.c.l.b16 %v177
    %v478 = vunpack.c.l.b16 %v178
    %v479 = vunpack.c.l.b16 %v179
    %v480 = vunpack.c.l.b16 %v180
    %v481 = vunpack.c.l.b16 %v181
    %v482 = vunpack.c.l.b16 %v182
    %v483 = vunpack.c.l.b16 %v183
    %v484 = vunpack.c.l.b16 %v184
    %v485 = vunpack.c.l.b16 %v185
    %v486 = vunpack.c.l.b16 %v186
    %v487 = vunpack.c.l.b16 %v187
    %v488 = vunpack.c.l.b16 %v188
    %v489 = vunpack.c.l.b16 %v189
    %v490 = vpack.c.b16 %v363, %v362
    %v491 = vpack.c.b16 %v365, %v364
    %v492 = vpack.c.b16 %v367, %v366
    %v493 = vpack.c.b16 %v369, %v368
    %v494 = vpack.c.b16 %v371, %v370
    %v495 = vpack.c.b16 %v373, %v372
    %v496 = vpack.c.b16 %v375, %v374
    %v497 = vpack.c.b16 %v377, %v376
    %v498 = vpack.c.b16 %v379, %v378
    %v499 = vpack.c.b16 %v381, %v380
    %v500 = vpack.c.b16 %v383, %v382
    %v501 = vpack.c.b16 %v385, %v384
    %v502 = vpack.c.b16 %v387, %v386
    %v503 = vpack.c.b16 %v389, %v388
    %v504 = vpack.c.b16 %v391, %v390
    %v505 = vpack.c.b16 %v393, %v392
    %v506 = vpack.c.b16 %v395, %v394
    %v507 = vpack.c.b16 %v397, %v396
    %v508 = vpack.c.b16 %v399, %v398
    %v509 = vpack.c.b16 %v401, %v400
    %v510 = vpack.c.b16 %v403, %v402
    %v511 = vpack.c.b16 %v405, %v404
    %v512 = vpack.c.b16 %v407, %v406
    %v513 = vpack.c.b16 %v409, %v408
    %v514 = vpack.c.b16 %v411, %v410
    %v515 = vpack.c.b16 %v413, %v412
    %v516 = vpack.c.b16 %v415, %v414
    %v517 = vpack.c.b16 %v417, %v416
    %v518 = vpack.c.b16 %v419, %v418
    %v519 = vpack.c.b16 %v421, %v420
    %v520 = vpack.c.b16 %v423, %v422
    %v521 = vpack.c.b16 %v425, %v424
    %v522 = vpack.c.b16 %v427, %v426
    %v523 = vpack.c.b16 %v429, %v428
    %v524 = vpack.c.b16 %v431, %v430
    %v525 = vpack.c.b16 %v433, %v432
    %v526 = vpack.c.b16 %v435, %v434
    %v527 = vpack.c.b16 %v437, %v436
    %v528 = vpack.c.b16 %v439, %v438
    %v529 = vpack.c.b16 %v441, %v440
    %v530 = vpack.c.b16 %v443, %v442
    %v531 = vpack.c.b16 %v445, %v444
    %v532 = vpack.c.b16 %v447, %v446
    %v533 = vpack.c.b16 %v449, %v448
    %v534 = vpack.c.b16 %v451, %v450
    %v535 = vpack.c.b16 %v453, %v452
    %v536 = vpack.c.b16 %v455, %v454
    %v537 = vpack.c.b16 %v457, %v456
    %v538 = vpack.c.b16 %v459, %v458
    %v539 = vpack.c.b16 %v461, %v460
    %v540 = vpack.c.b16 %v463, %v462
    %v541 = vpack.c.b16 %v465, %v464
    %v542 = vpack.c.b16 %v467, %v466
    %v543 = vpack.c.b16 %v469, %v468
    %v544 = vpack.c.b16 %v471, %v470
    %v545 = vpack.c.b16 %v473, %v472
    %v546 = vpack.c.b16 %v475, %v474
    %v547 = vpack.c.b16 %v477, %v476
    %v548 = vpack.c.b16 %v479, %v478
    %v549 = vpack.c.b16 %v481, %v480
    %v550 = vpack.c.b16 %v483, %v482
    %v551 = vpack.c.b16 %v485, %v484
    %v552 = vpack.c.b16 %v487, %v486
    %v553 = vpack.c.b16 %v489, %v488
    %618 = vmatprep.subr.bf16.mxu0 0
    %619 = vmatpush1.bf16.msra.mxu0 %v490
    %620 = vmatprep.subr.bf16.mxu0 0
    %621 = vmatpush1.bf16.msra.mxu0 %v491
    %622 = vmatprep.subr.bf16.mxu0 0
    %623 = vmatpush1.bf16.msra.mxu0 %v492
    %624 = vmatprep.subr.bf16.mxu0 0
    %625 = vmatpush1.bf16.msra.mxu0 %v493
    %626 = vmatprep.subr.bf16.mxu0 0
    %627 = vmatpush1.bf16.msra.mxu0 %v494
    %628 = vmatprep.subr.bf16.mxu0 0
    %629 = vmatpush1.bf16.msra.mxu0 %v495
    %630 = vmatprep.subr.bf16.mxu0 0
    %631 = vmatpush1.bf16.msra.mxu0 %v496
    %632 = vmatprep.subr.bf16.mxu0 0
    %633 = vmatpush1.bf16.msra.mxu0 %v497
    %634 = vmatprep.subr.bf16.mxu0 0
    %635 = vmatpush1.bf16.msra.mxu0 %v498
    %636 = vmatprep.subr.bf16.mxu0 0
    %637 = vmatpush1.bf16.msra.mxu0 %v499
    %638 = vmatprep.subr.bf16.mxu0 0
    %639 = vmatpush1.bf16.msra.mxu0 %v500
    %640 = vmatprep.subr.bf16.mxu0 0
    %641 = vmatpush1.bf16.msra.mxu0 %v501
    %642 = vmatprep.subr.bf16.mxu0 0
    %643 = vmatpush1.bf16.msra.mxu0 %v502
    %644 = vmatprep.subr.bf16.mxu0 0
    %645 = vmatpush1.bf16.msra.mxu0 %v503
    %646 = vmatprep.subr.bf16.mxu0 0
    %647 = vmatpush1.bf16.msra.mxu0 %v504
    %648 = vmatprep.subr.bf16.mxu0 0
    %649 = vmatpush1.bf16.msra.mxu0 %v505
    %650 = vmatprep.mubr.bf16.mxu0 %v219
    %651 = vmatmul.mubr.bf16.gmra.mrb[0].mxu0 %v218
    %v652 = vpop.f32.mrb[0].mxu0
    %v653 = vadd.f32 %v193, %v652
    %v654 = vpop.f32.mrb[0].mxu0
    %v655 = vpop.f32.mrb[0].mxu0
    %v656 = vadd.f32 %v193, %v655
    %v657 = vpop.f32.mrb[0].mxu0
    %658 = vdwg.mxu0
    %659 = vmatprep.subr.bf16.mxu0 0
    %660 = vmatpush1.bf16.msra.mxu0 %v506
    %661 = vmatprep.subr.bf16.mxu0 0
    %662 = vmatpush1.bf16.msra.mxu0 %v507
    %663 = vmatprep.subr.bf16.mxu0 0
    %664 = vmatpush1.bf16.msra.mxu0 %v508
    %665 = vmatprep.subr.bf16.mxu0 0
    %666 = vmatpush1.bf16.msra.mxu0 %v509
    %667 = vmatprep.subr.bf16.mxu0 0
    %668 = vmatpush1.bf16.msra.mxu0 %v510
    %669 = vmatprep.subr.bf16.mxu0 0
    %670 = vmatpush1.bf16.msra.mxu0 %v511
    %671 = vmatprep.subr.bf16.mxu0 0
    %672 = vmatpush1.bf16.msra.mxu0 %v512
    %673 = vmatprep.subr.bf16.mxu0 0
    %674 = vmatpush1.bf16.msra.mxu0 %v513
    %675 = vmatprep.subr.bf16.mxu0 0
    %676 = vmatpush1.bf16.msra.mxu0 %v514
    %677 = vmatprep.subr.bf16.mxu0 0
    %678 = vmatpush1.bf16.msra.mxu0 %v515
    %679 = vmatprep.subr.bf16.mxu0 0
    %680 = vmatpush1.bf16.msra.mxu0 %v516
    %681 = vmatprep.subr.bf16.mxu0 0
    %682 = vmatpush1.bf16.msra.mxu0 %v517
    %683 = vmatprep.subr.bf16.mxu0 0
    %684 = vmatpush1.bf16.msra.mxu0 %v518
    %685 = vmatprep.subr.bf16.mxu0 0
    %686 = vmatpush1.bf16.msra.mxu0 %v519
    %687 = vmatprep.subr.bf16.mxu0 0
    %688 = vmatpush1.bf16.msra.mxu0 %v520
    %689 = vmatprep.subr.bf16.mxu0 0
    %690 = vmatpush1.bf16.msra.mxu0 %v521
    %691 = vmatprep.mubr.bf16.mxu0 %v221
    %692 = vmatmul.mubr.bf16.gmra.mrb[0].mxu0 %v220
    %v693 = vpop.f32.mrb[0].mxu0
    %v694 = vadd.f32 %v653, %v693
    %v695 = vpop.f32.mrb[0].mxu0
    %v696 = vpop.f32.mrb[0].mxu0
    %v697 = vadd.f32 %v656, %v696
    %v698 = vpop.f32.mrb[0].mxu0
    %699 = vdwg.mxu0
    %700 = vmatprep.subr.bf16.mxu0 0
    %701 = vmatpush1.bf16.msra.mxu0 %v522
    %702 = vmatprep.subr.bf16.mxu0 0
    %703 = vmatpush1.bf16.msra.mxu0 %v523
    %704 = vmatprep.subr.bf16.mxu0 0
    %705 = vmatpush1.bf16.msra.mxu0 %v524
    %706 = vmatprep.subr.bf16.mxu0 0
    %707 = vmatpush1.bf16.msra.mxu0 %v525
    %708 = vmatprep.subr.bf16.mxu0 0
    %709 = vmatpush1.bf16.msra.mxu0 %v526
    %710 = vmatprep.subr.bf16.mxu0 0
    %711 = vmatpush1.bf16.msra.mxu0 %v527
    %712 = vmatprep.subr.bf16.mxu0 0
    %713 = vmatpush1.bf16.msra.mxu0 %v528
    %714 = vmatprep.subr.bf16.mxu0 0
    %715 = vmatpush1.bf16.msra.mxu0 %v529
    %716 = vmatprep.subr.bf16.mxu0 0
    %717 = vmatpush1.bf16.msra.mxu0 %v530
    %718 = vmatprep.subr.bf16.mxu0 0
    %719 = vmatpush1.bf16.msra.mxu0 %v531
    %720 = vmatprep.subr.bf16.mxu0 0
    %721 = vmatpush1.bf16.msra.mxu0 %v532
    %722 = vmatprep.subr.bf16.mxu0 0
    %723 = vmatpush1.bf16.msra.mxu0 %v533
    %724 = vmatprep.subr.bf16.mxu0 0
    %725 = vmatpush1.bf16.msra.mxu0 %v534
    %726 = vmatprep.subr.bf16.mxu0 0
    %727 = vmatpush1.bf16.msra.mxu0 %v535
    %728 = vmatprep.subr.bf16.mxu0 0
    %729 = vmatpush1.bf16.msra.mxu0 %v536
    %730 = vmatprep.subr.bf16.mxu0 0
    %731 = vmatpush1.bf16.msra.mxu0 %v537
    %732 = vmatprep.mubr.bf16.mxu0 %v223
    %733 = vmatmul.mubr.bf16.gmra.mrb[0].mxu0 %v222
    %v734 = vpop.f32.mrb[0].mxu0
    %v735 = vadd.f32 %v694, %v734
    %v736 = vpop.f32.mrb[0].mxu0
    %v737 = vpop.f32.mrb[0].mxu0
    %v738 = vadd.f32 %v697, %v737
    %v739 = vpop.f32.mrb[0].mxu0
    %740 = vdwg.mxu0
    %741 = vmatprep.subr.bf16.mxu0 0
    %742 = vmatpush1.bf16.msra.mxu0 %v538
    %743 = vmatprep.subr.bf16.mxu0 0
    %744 = vmatpush1.bf16.msra.mxu0 %v539
    %745 = vmatprep.subr.bf16.mxu0 0
    %746 = vmatpush1.bf16.msra.mxu0 %v540
    %747 = vmatprep.subr.bf16.mxu0 0
    %748 = vmatpush1.bf16.msra.mxu0 %v541
    %749 = vmatprep.subr.bf16.mxu0 0
    %750 = vmatpush1.bf16.msra.mxu0 %v542
    %751 = vmatprep.subr.bf16.mxu0 0
    %752 = vmatpush1.bf16.msra.mxu0 %v543
    %753 = vmatprep.subr.bf16.mxu0 0
    %754 = vmatpush1.bf16.msra.mxu0 %v544
    %755 = vmatprep.subr.bf16.mxu0 0
    %756 = vmatpush1.bf16.msra.mxu0 %v545
    %757 = vmatprep.subr.bf16.mxu0 0
    %758 = vmatpush1.bf16.msra.mxu0 %v546
    %759 = vmatprep.subr.bf16.mxu0 0
    %760 = vmatpush1.bf16.msra.mxu0 %v547
    %761 = vmatprep.subr.bf16.mxu0 0
    %762 = vmatpush1.bf16.msra.mxu0 %v548
    %763 = vmatprep.subr.bf16.mxu0 0
    %764 = vmatpush1.bf16.msra.mxu0 %v549
    %765 = vmatprep.subr.bf16.mxu0 0
    %766 = vmatpush1.bf16.msra.mxu0 %v550
    %767 = vmatprep.subr.bf16.mxu0 0
    %768 = vmatpush1.bf16.msra.mxu0 %v551
    %769 = vmatprep.subr.bf16.mxu0 0
    %770 = vmatpush1.bf16.msra.mxu0 %v552
    %771 = vmatprep.subr.bf16.mxu0 0
    %772 = vmatpush1.bf16.msra.mxu0 %v553
    %773 = vmatprep.mubr.bf16.mxu0 %v225
    %774 = vmatmul.mubr.bf16.gmra.mrb[0].mxu0 %v224
    %v775 = vpop.f32.mrb[0].mxu0
    %v776 = vadd.f32 %v735, %v775
    %v777 = vpop.f32.mrb[0].mxu0
    %v778 = vpop.f32.mrb[0].mxu0
    %v779 = vadd.f32 %v738, %v778
    %v780 = vpop.f32.mrb[0].mxu0
    %781 = vdwg.mxu0
    %v782 = vmax.f32 %v776, 0.0
    %v783 = vmax.f32 %v779, 0.0
    %v784 = vld [vmem:[%s0] sm:$0xff]
    %v785 = vld [vmem:[%s0 + $0x8] sm:$0xff]
    %v786 = vld [vmem:[%s0 + $0x10] sm:$0xff]
    %v787 = vld [vmem:[%s0 + $0x18] sm:$0xff]
    %v788 = vld [vmem:[%s0 + $0x20] sm:$0xff]
    %v789 = vld [vmem:[%s0 + $0x28] sm:$0xff]
    %v790 = vld [vmem:[#allocation2] sm:$0xf]
    %v791 = vld [vmem:[#allocation2 + $0x4] sm:$0xf]
    %v792 = vld [vmem:[#allocation2 + $0x8] sm:$0xf]
    %v793 = vld [vmem:[#allocation2 + $0xc] sm:$0xf]
    %v794 = vld [vmem:[#allocation2 + $0x10] sm:$0xf]
    %v795 = vld [vmem:[#allocation2 + $0x14] sm:$0xf]
    %v796 = vld [vmem:[#allocation2 + $0x18] sm:$0xf]
    %v797 = vld [vmem:[#allocation2 + $0x1c] sm:$0xf]
    %v798 = vld [vmem:[#allocation2 + $0x20] sm:$0xf]
    %v799 = vld [vmem:[#allocation2 + $0x24] sm:$0xf]
    %v800 = vld [vmem:[#allocation2 + $0x28] sm:$0xf]
    %v801 = vld [vmem:[#allocation2 + $0x2c] sm:$0xf]
    %v802 = vld [vmem:[#allocation2 + $0x30] sm:$0xf]
    %v803 = vld [vmem:[#allocation2 + $0x34] sm:$0xf]
    %v804 = vld [vmem:[#allocation2 + $0x38] sm:$0xf]
    %v805 = vld [vmem:[#allocation2 + $0x3c] sm:$0xf]
    %v806 = vld [vmem:[#allocation2 + $0x40] sm:$0xf]
    %v807 = vld [vmem:[#allocation2 + $0x44] sm:$0xf]
    %v808 = vld [vmem:[#allocation2 + $0x48] sm:$0xf]
    %v809 = vld [vmem:[#allocation2 + $0x4c] sm:$0xf]
    %v810 = vld [vmem:[#allocation2 + $0x50] sm:$0xf]
    %v811 = vld [vmem:[#allocation2 + $0x54] sm:$0xf]
    %v812 = vld [vmem:[#allocation2 + $0x58] sm:$0xf]
    %v813 = vld [vmem:[#allocation2 + $0x5c] sm:$0xf]
    %v814 = vld [vmem:[#allocation2 + $0x60] sm:$0xf]
    %v815 = vld [vmem:[#allocation2 + $0x64] sm:$0xf]
    %v816 = vld [vmem:[#allocation2 + $0x68] sm:$0xf]
    %v817 = vld [vmem:[#allocation2 + $0x6c] sm:$0xf]
    %v818 = vld [vmem:[#allocation2 + $0x70] sm:$0xf]
    %v819 = vld [vmem:[#allocation2 + $0x74] sm:$0xf]
    %v820 = vld [vmem:[#allocation2 + $0x78] sm:$0xf]
    %v821 = vld [vmem:[#allocation2 + $0x7c] sm:$0xf]
    %v822 = vld [vmem:[#allocation2 + $0x80] sm:$0xf]
    %v823 = vld [vmem:[#allocation2 + $0x84] sm:$0xf]
    %v824 = vld [vmem:[#allocation2 + $0x88] sm:$0xf]
    %v825 = vld [vmem:[#allocation2 + $0x8c] sm:$0xf]
    %v826 = vld [vmem:[#allocation2 + $0x90] sm:$0xf]
    %v827 = vld [vmem:[#allocation2 + $0x94] sm:$0xf]
    %v828 = vld [vmem:[#allocation2 + $0x98] sm:$0xf]
    %v829 = vld [vmem:[#allocation2 + $0x9c] sm:$0xf]
    %v830 = vld [vmem:[#allocation2 + $0xa0] sm:$0xf]
    %v831 = vld [vmem:[#allocation2 + $0xa4] sm:$0xf]
    %v832 = vld [vmem:[#allocation2 + $0xa8] sm:$0xf]
    %v833 = vld [vmem:[#allocation2 + $0xac] sm:$0xf]
    %v834 = vld [vmem:[#allocation2 + $0xb0] sm:$0xf]
    %v835 = vld [vmem:[#allocation2 + $0xb4] sm:$0xf]
    %v836 = vld [vmem:[#allocation2 + $0xb8] sm:$0xf]
    %v837 = vld [vmem:[#allocation2 + $0xbc] sm:$0xf]
    %v838 = vld [vmem:[#allocation2 + $0xc0] sm:$0xf]
    %v839 = vld [vmem:[#allocation2 + $0xc4] sm:$0xf]
    %v840 = vld [vmem:[#allocation2 + $0xc8] sm:$0xf]
    %v841 = vld [vmem:[#allocation2 + $0xcc] sm:$0xf]
    %v842 = vld [vmem:[#allocation2 + $0xd0] sm:$0xf]
    %v843 = vld [vmem:[#allocation2 + $0xd4] sm:$0xf]
    %v844 = vld [vmem:[#allocation2 + $0xd8] sm:$0xf]
    %v845 = vld [vmem:[#allocation2 + $0xdc] sm:$0xf]
    %v846 = vld [vmem:[#allocation2 + $0xe0] sm:$0xf]
    %v847 = vld [vmem:[#allocation2 + $0xe4] sm:$0xf]
    %v848 = vld [vmem:[#allocation2 + $0xe8] sm:$0xf]
    %v849 = vld [vmem:[#allocation2 + $0xec] sm:$0xf]
    %v850 = vld [vmem:[#allocation2 + $0xf0] sm:$0xf]
    %v851 = vld [vmem:[#allocation2 + $0xf4] sm:$0xf]
    %v852 = vld [vmem:[#allocation2 + $0xf8] sm:$0xf]
    %v853 = vld [vmem:[#allocation2 + $0xfc] sm:$0xf]
    %v854 = vld [vmem:[#allocation2 + $0x100] sm:$0xf]
    %v855 = vld [vmem:[#allocation2 + $0x104] sm:$0xf]
    %v856 = vld [vmem:[#allocation2 + $0x108] sm:$0xf]
    %v857 = vld [vmem:[#allocation2 + $0x10c] sm:$0xf]
    %v858 = vld [vmem:[#allocation2 + $0x110] sm:$0xf]
    %v859 = vld [vmem:[#allocation2 + $0x114] sm:$0xf]
    %v860 = vld [vmem:[#allocation2 + $0x118] sm:$0xf]
    %v861 = vld [vmem:[#allocation2 + $0x11c] sm:$0xf]
    %v862 = vld [vmem:[#allocation2 + $0x120] sm:$0xf]
    %v863 = vld [vmem:[#allocation2 + $0x124] sm:$0xf]
    %v864 = vld [vmem:[#allocation2 + $0x128] sm:$0xf]
    %v865 = vld [vmem:[#allocation2 + $0x12c] sm:$0xf]
    %v866 = vld [vmem:[#allocation2 + $0x130] sm:$0xf]
    %v867 = vld [vmem:[#allocation2 + $0x134] sm:$0xf]
    %v868 = vld [vmem:[#allocation2 + $0x138] sm:$0xf]
    %v869 = vld [vmem:[#allocation2 + $0x13c] sm:$0xf]
    %v870 = vld [vmem:[#allocation2 + $0x140] sm:$0xf]
    %v871 = vld [vmem:[#allocation2 + $0x144] sm:$0xf]
    %v872 = vld [vmem:[#allocation2 + $0x148] sm:$0xf]
    %v873 = vld [vmem:[#allocation2 + $0x14c] sm:$0xf]
    %v874 = vld [vmem:[#allocation2 + $0x150] sm:$0xf]
    %v875 = vld [vmem:[#allocation2 + $0x154] sm:$0xf]
    %v876 = vld [vmem:[#allocation2 + $0x158] sm:$0xf]
    %v877 = vld [vmem:[#allocation2 + $0x15c] sm:$0xf]
    %v878 = vld [vmem:[#allocation2 + $0x160] sm:$0xf]
    %v879 = vld [vmem:[#allocation2 + $0x164] sm:$0xf]
    %v880 = vld [vmem:[#allocation2 + $0x168] sm:$0xf]
    %v881 = vld [vmem:[#allocation2 + $0x16c] sm:$0xf]
    %v882 = vld [vmem:[#allocation2 + $0x170] sm:$0xf]
    %v883 = vld [vmem:[#allocation2 + $0x174] sm:$0xf]
    %v884 = vld [vmem:[#allocation2 + $0x178] sm:$0xf]
    %v885 = vld [vmem:[#allocation2 + $0x17c] sm:$0xf]
    %v886 = vlaneseq
    %v887 = vshrl.u32 %v886, 7
    %v888 = vsub.s32 0, %v887
    %v889 = vrot.slane %v53, %v888
    %v896 = vunpack.c.l.b16 %v784
    %v897 = vunpack.c.h.b16 %v784
    %v898 = vunpack.c.l.b16 %v785
    %v899 = vunpack.c.h.b16 %v785
    %v900 = vunpack.c.l.b16 %v786
    %v901 = vunpack.c.h.b16 %v786
    %v902 = vunpack.c.l.b16 %v787
    %v903 = vunpack.c.h.b16 %v787
    %v904 = vunpack.c.l.b16 %v788
    %v905 = vunpack.c.h.b16 %v788
    %v906 = vunpack.c.l.b16 %v789
    %v907 = vunpack.c.h.b16 %v789
    %v908 = vpack.c.b16 %v902, %v896
    %v909 = vpack.c.b16 %v903, %v897
    %v910 = vpack.c.b16 %v904, %v898
    %v911 = vpack.c.b16 %v905, %v899
    %v912 = vpack.c.b16 %v906, %v900
    %v913 = vpack.c.b16 %v907, %v901
    %v1016 = vunpack.c.l.b16 %v790
    %v1017 = vunpack.c.l.b16 %v791
    %v1018 = vunpack.c.l.b16 %v792
    %v1019 = vunpack.c.l.b16 %v793
    %v1020 = vunpack.c.l.b16 %v794
    %v1021 = vunpack.c.l.b16 %v795
    %v1022 = vunpack.c.l.b16 %v796
    %v1023 = vunpack.c.l.b16 %v797
    %v1024 = vunpack.c.l.b16 %v798
    %v1025 = vunpack.c.l.b16 %v799
    %v1026 = vunpack.c.l.b16 %v800
    %v1027 = vunpack.c.l.b16 %v801
    %v1028 = vunpack.c.l.b16 %v802
    %v1029 = vunpack.c.l.b16 %v803
    %v1030 = vunpack.c.l.b16 %v804
    %v1031 = vunpack.c.l.b16 %v805
    %v1032 = vunpack.c.l.b16 %v806
    %v1033 = vunpack.c.l.b16 %v807
    %v1034 = vunpack.c.l.b16 %v808
    %v1035 = vunpack.c.l.b16 %v809
    %v1036 = vunpack.c.l.b16 %v810
    %v1037 = vunpack.c.l.b16 %v811
    %v1038 = vunpack.c.l.b16 %v812
    %v1039 = vunpack.c.l.b16 %v813
    %v1040 = vunpack.c.l.b16 %v814
    %v1041 = vunpack.c.l.b16 %v815
    %v1042 = vunpack.c.l.b16 %v816
    %v1043 = vunpack.c.l.b16 %v817
    %v1044 = vunpack.c.l.b16 %v818
    %v1045 = vunpack.c.l.b16 %v819
    %v1046 = vunpack.c.l.b16 %v820
    %v1047 = vunpack.c.l.b16 %v821
    %v1048 = vunpack.c.l.b16 %v822
    %v1049 = vunpack.c.l.b16 %v823
    %v1050 = vunpack.c.l.b16 %v824
    %v1051 = vunpack.c.l.b16 %v825
    %v1052 = vunpack.c.l.b16 %v826
    %v1053 = vunpack.c.l.b16 %v827
    %v1054 = vunpack.c.l.b16 %v828
    %v1055 = vunpack.c.l.b16 %v829
    %v1056 = vunpack.c.l.b16 %v830
    %v1057 = vunpack.c.l.b16 %v831
    %v1058 = vunpack.c.l.b16 %v832
    %v1059 = vunpack.c.l.b16 %v833
    %v1060 = vunpack.c.l.b16 %v834
    %v1061 = vunpack.c.l.b16 %v835
    %v1062 = vunpack.c.l.b16 %v836
    %v1063 = vunpack.c.l.b16 %v837
    %v1064 = vunpack.c.l.b16 %v838
    %v1065 = vunpack.c.l.b16 %v839
    %v1066 = vunpack.c.l.b16 %v840
    %v1067 = vunpack.c.l.b16 %v841
    %v1068 = vunpack.c.l.b16 %v842
    %v1069 = vunpack.c.l.b16 %v843
    %v1070 = vunpack.c.l.b16 %v844
    %v1071 = vunpack.c.l.b16 %v845
    %v1072 = vunpack.c.l.b16 %v846
    %v1073 = vunpack.c.l.b16 %v847
    %v1074 = vunpack.c.l.b16 %v848
    %v1075 = vunpack.c.l.b16 %v849
    %v1076 = vunpack.c.l.b16 %v850
    %v1077 = vunpack.c.l.b16 %v851
    %v1078 = vunpack.c.l.b16 %v852
    %v1079 = vunpack.c.l.b16 %v853
    %v1080 = vunpack.c.l.b16 %v854
    %v1081 = vunpack.c.l.b16 %v855
    %v1082 = vunpack.c.l.b16 %v856
    %v1083 = vunpack.c.l.b16 %v857
    %v1084 = vunpack.c.l.b16 %v858
    %v1085 = vunpack.c.l.b16 %v859
    %v1086 = vunpack.c.l.b16 %v860
    %v1087 = vunpack.c.l.b16 %v861
    %v1088 = vunpack.c.l.b16 %v862
    %v1089 = vunpack.c.l.b16 %v863
    %v1090 = vunpack.c.l.b16 %v864
    %v1091 = vunpack.c.l.b16 %v865
    %v1092 = vunpack.c.l.b16 %v866
    %v1093 = vunpack.c.l.b16 %v867
    %v1094 = vunpack.c.l.b16 %v868
    %v1095 = vunpack.c.l.b16 %v869
    %v1096 = vunpack.c.l.b16 %v870
    %v1097 = vunpack.c.l.b16 %v871
    %v1098 = vunpack.c.l.b16 %v872
    %v1099 = vunpack.c.l.b16 %v873
    %v1100 = vunpack.c.l.b16 %v874
    %v1101 = vunpack.c.l.b16 %v875
    %v1102 = vunpack.c.l.b16 %v876
    %v1103 = vunpack.c.l.b16 %v877
    %v1104 = vunpack.c.l.b16 %v878
    %v1105 = vunpack.c.l.b16 %v879
    %v1106 = vunpack.c.l.b16 %v880
    %v1107 = vunpack.c.l.b16 %v881
    %v1108 = vunpack.c.l.b16 %v882
    %v1109 = vunpack.c.l.b16 %v883
    %v1110 = vunpack.c.l.b16 %v884
    %v1111 = vunpack.c.l.b16 %v885
    %v1112 = vpack.c.b16 %v1017, %v1016
    %v1113 = vpack.c.b16 %v1019, %v1018
    %v1114 = vpack.c.b16 %v1021, %v1020
    %v1115 = vpack.c.b16 %v1023, %v1022
    %v1116 = vpack.c.b16 %v1025, %v1024
    %v1117 = vpack.c.b16 %v1027, %v1026
    %v1118 = vpack.c.b16 %v1029, %v1028
    %v1119 = vpack.c.b16 %v1031, %v1030
    %v1120 = vpack.c.b16 %v1033, %v1032
    %v1121 = vpack.c.b16 %v1035, %v1034
    %v1122 = vpack.c.b16 %v1037, %v1036
    %v1123 = vpack.c.b16 %v1039, %v1038
    %v1124 = vpack.c.b16 %v1041, %v1040
    %v1125 = vpack.c.b16 %v1043, %v1042
    %v1126 = vpack.c.b16 %v1045, %v1044
    %v1127 = vpack.c.b16 %v1047, %v1046
    %v1128 = vpack.c.b16 %v1049, %v1048
    %v1129 = vpack.c.b16 %v1051, %v1050
    %v1130 = vpack.c.b16 %v1053, %v1052
    %v1131 = vpack.c.b16 %v1055, %v1054
    %v1132 = vpack.c.b16 %v1057, %v1056
    %v1133 = vpack.c.b16 %v1059, %v1058
    %v1134 = vpack.c.b16 %v1061, %v1060
    %v1135 = vpack.c.b16 %v1063, %v1062
    %v1136 = vpack.c.b16 %v1065, %v1064
    %v1137 = vpack.c.b16 %v1067, %v1066
    %v1138 = vpack.c.b16 %v1069, %v1068
    %v1139 = vpack.c.b16 %v1071, %v1070
    %v1140 = vpack.c.b16 %v1073, %v1072
    %v1141 = vpack.c.b16 %v1075, %v1074
    %v1142 = vpack.c.b16 %v1077, %v1076
    %v1143 = vpack.c.b16 %v1079, %v1078
    %v1144 = vpack.c.b16 %v1081, %v1080
    %v1145 = vpack.c.b16 %v1083, %v1082
    %v1146 = vpack.c.b16 %v1085, %v1084
    %v1147 = vpack.c.b16 %v1087, %v1086
    %v1148 = vpack.c.b16 %v1089, %v1088
    %v1149 = vpack.c.b16 %v1091, %v1090
    %v1150 = vpack.c.b16 %v1093, %v1092
    %v1151 = vpack.c.b16 %v1095, %v1094
    %v1152 = vpack.c.b16 %v1097, %v1096
    %v1153 = vpack.c.b16 %v1099, %v1098
    %v1154 = vpack.c.b16 %v1101, %v1100
    %v1155 = vpack.c.b16 %v1103, %v1102
    %v1156 = vpack.c.b16 %v1105, %v1104
    %v1157 = vpack.c.b16 %v1107, %v1106
    %v1158 = vpack.c.b16 %v1109, %v1108
    %v1159 = vpack.c.b16 %v1111, %v1110
    %1208 = vmatprep.subr.bf16.mxu0 0
    %1209 = vmatpush1.bf16.msra.mxu0 %v1112
    %1210 = vmatprep.subr.bf16.mxu0 0
    %1211 = vmatpush1.bf16.msra.mxu0 %v1113
    %1212 = vmatprep.subr.bf16.mxu0 0
    %1213 = vmatpush1.bf16.msra.mxu0 %v1114
    %1214 = vmatprep.subr.bf16.mxu0 0
    %1215 = vmatpush1.bf16.msra.mxu0 %v1115
    %1216 = vmatprep.subr.bf16.mxu0 0
    %1217 = vmatpush1.bf16.msra.mxu0 %v1116
    %1218 = vmatprep.subr.bf16.mxu0 0
    %1219 = vmatpush1.bf16.msra.mxu0 %v1117
    %1220 = vmatprep.subr.bf16.mxu0 0
    %1221 = vmatpush1.bf16.msra.mxu0 %v1118
    %1222 = vmatprep.subr.bf16.mxu0 0
    %1223 = vmatpush1.bf16.msra.mxu0 %v1119
    %1224 = vmatprep.subr.bf16.mxu0 0
    %1225 = vmatpush1.bf16.msra.mxu0 %v1120
    %1226 = vmatprep.subr.bf16.mxu0 0
    %1227 = vmatpush1.bf16.msra.mxu0 %v1121
    %1228 = vmatprep.subr.bf16.mxu0 0
    %1229 = vmatpush1.bf16.msra.mxu0 %v1122
    %1230 = vmatprep.subr.bf16.mxu0 0
    %1231 = vmatpush1.bf16.msra.mxu0 %v1123
    %1232 = vmatprep.subr.bf16.mxu0 0
    %1233 = vmatpush1.bf16.msra.mxu0 %v1124
    %1234 = vmatprep.subr.bf16.mxu0 0
    %1235 = vmatpush1.bf16.msra.mxu0 %v1125
    %1236 = vmatprep.subr.bf16.mxu0 0
    %1237 = vmatpush1.bf16.msra.mxu0 %v1126
    %1238 = vmatprep.subr.bf16.mxu0 0
    %1239 = vmatpush1.bf16.msra.mxu0 %v1127
    %1240 = vmatprep.mubr.bf16.mxu0 %v909
    %1241 = vmatmul.mubr.bf16.gmra.mrb[0].mxu0 %v908
    %v1242 = vpop.f32.mrb[0].mxu0
    %v1243 = vadd.f32 %v889, %v1242
    %v1244 = vpop.f32.mrb[0].mxu0
    %v1245 = vpop.f32.mrb[0].mxu0
    %v1246 = vadd.f32 %v889, %v1245
    %v1247 = vpop.f32.mrb[0].mxu0
    %1248 = vdwg.mxu0
    %1249 = vmatprep.subr.bf16.mxu0 0
    %1250 = vmatpush1.bf16.msra.mxu0 %v1128
    %1251 = vmatprep.subr.bf16.mxu0 0
    %1252 = vmatpush1.bf16.msra.mxu0 %v1129
    %1253 = vmatprep.subr.bf16.mxu0 0
    %1254 = vmatpush1.bf16.msra.mxu0 %v1130
    %1255 = vmatprep.subr.bf16.mxu0 0
    %1256 = vmatpush1.bf16.msra.mxu0 %v1131
    %1257 = vmatprep.subr.bf16.mxu0 0
    %1258 = vmatpush1.bf16.msra.mxu0 %v1132
    %1259 = vmatprep.subr.bf16.mxu0 0
    %1260 = vmatpush1.bf16.msra.mxu0 %v1133
    %1261 = vmatprep.subr.bf16.mxu0 0
    %1262 = vmatpush1.bf16.msra.mxu0 %v1134
    %1263 = vmatprep.subr.bf16.mxu0 0
    %1264 = vmatpush1.bf16.msra.mxu0 %v1135
    %1265 = vmatprep.subr.bf16.mxu0 0
    %1266 = vmatpush1.bf16.msra.mxu0 %v1136
    %1267 = vmatprep.subr.bf16.mxu0 0
    %1268 = vmatpush1.bf16.msra.mxu0 %v1137
    %1269 = vmatprep.subr.bf16.mxu0 0
    %1270 = vmatpush1.bf16.msra.mxu0 %v1138
    %1271 = vmatprep.subr.bf16.mxu0 0
    %1272 = vmatpush1.bf16.msra.mxu0 %v1139
    %1273 = vmatprep.subr.bf16.mxu0 0
    %1274 = vmatpush1.bf16.msra.mxu0 %v1140
    %1275 = vmatprep.subr.bf16.mxu0 0
    %1276 = vmatpush1.bf16.msra.mxu0 %v1141
    %1277 = vmatprep.subr.bf16.mxu0 0
    %1278 = vmatpush1.bf16.msra.mxu0 %v1142
    %1279 = vmatprep.subr.bf16.mxu0 0
    %1280 = vmatpush1.bf16.msra.mxu0 %v1143
    %1281 = vmatprep.mubr.bf16.mxu0 %v911
    %1282 = vmatmul.mubr.bf16.gmra.mrb[0].mxu0 %v910
    %v1283 = vpop.f32.mrb[0].mxu0
    %v1284 = vadd.f32 %v1243, %v1283
    %v1285 = vpop.f32.mrb[0].mxu0
    %v1286 = vpop.f32.mrb[0].mxu0
    %v1287 = vadd.f32 %v1246, %v1286
    %v1288 = vpop.f32.mrb[0].mxu0
    %1289 = vdwg.mxu0
    %1290 = vmatprep.subr.bf16.mxu0 0
    %1291 = vmatpush1.bf16.msra.mxu0 %v1144
    %1292 = vmatprep.subr.bf16.mxu0 0
    %1293 = vmatpush1.bf16.msra.mxu0 %v1145
    %1294 = vmatprep.subr.bf16.mxu0 0
    %1295 = vmatpush1.bf16.msra.mxu0 %v1146
    %1296 = vmatprep.subr.bf16.mxu0 0
    %1297 = vmatpush1.bf16.msra.mxu0 %v1147
    %1298 = vmatprep.subr.bf16.mxu0 0
    %1299 = vmatpush1.bf16.msra.mxu0 %v1148
    %1300 = vmatprep.subr.bf16.mxu0 0
    %1301 = vmatpush1.bf16.msra.mxu0 %v1149
    %1302 = vmatprep.subr.bf16.mxu0 0
    %1303 = vmatpush1.bf16.msra.mxu0 %v1150
    %1304 = vmatprep.subr.bf16.mxu0 0
    %1305 = vmatpush1.bf16.msra.mxu0 %v1151
    %1306 = vmatprep.subr.bf16.mxu0 0
    %1307 = vmatpush1.bf16.msra.mxu0 %v1152
    %1308 = vmatprep.subr.bf16.mxu0 0
    %1309 = vmatpush1.bf16.msra.mxu0 %v1153
    %1310 = vmatprep.subr.bf16.mxu0 0
    %1311 = vmatpush1.bf16.msra.mxu0 %v1154
    %1312 = vmatprep.subr.bf16.mxu0 0
    %1313 = vmatpush1.bf16.msra.mxu0 %v1155
    %1314 = vmatprep.subr.bf16.mxu0 0
    %1315 = vmatpush1.bf16.msra.mxu0 %v1156
    %1316 = vmatprep.subr.bf16.mxu0 0
    %1317 = vmatpush1.bf16.msra.mxu0 %v1157
    %1318 = vmatprep.subr.bf16.mxu0 0
    %1319 = vmatpush1.bf16.msra.mxu0 %v1158
    %1320 = vmatprep.subr.bf16.mxu0 0
    %1321 = vmatpush1.bf16.msra.mxu0 %v1159
    %1322 = vmatprep.mubr.bf16.mxu0 %v913
    %1323 = vmatmul.mubr.bf16.gmra.mrb[0].mxu0 %v912
    %v1324 = vpop.f32.mrb[0].mxu0
    %v1325 = vadd.f32 %v1284, %v1324
    %v1326 = vpop.f32.mrb[0].mxu0
    %v1327 = vpop.f32.mrb[0].mxu0
    %v1328 = vadd.f32 %v1287, %v1327
    %v1329 = vpop.f32.mrb[0].mxu0
    %1330 = vdwg.mxu0
    %v1331 = vmax.f32 %v1325, 0.0
    %v1332 = vmax.f32 %v1328, 0.0
    %v1333 = vpack.c.bf16 %v783, %v782
    %v1334 = vpack.c.bf16 %v1332, %v1331
    %v1335 = vld [vmem:[%s4] sm:$0xf]
    %v1336 = vld [vmem:[%s4 + $0x4] sm:$0xf]
    %v1337 = vld [vmem:[%s4 + $0x8] sm:$0xf]
    %v1338 = vld [vmem:[%s4 + $0xc] sm:$0xf]
    %v1339 = vld [vmem:[%s4 + $0x10] sm:$0xf]
    %v1340 = vld [vmem:[%s4 + $0x14] sm:$0xf]
    %v1341 = vld [vmem:[%s4 + $0x18] sm:$0xf]
    %v1342 = vld [vmem:[%s4 + $0x1c] sm:$0xf]
    %v1343 = vld [vmem:[%s4 + $0x20] sm:$0xf]
    %v1344 = vld [vmem:[%s4 + $0x24] sm:$0xf]
    %v1345 = vld [vmem:[%s4 + $0x28] sm:$0xf]
    %v1346 = vld [vmem:[%s4 + $0x2c] sm:$0xf]
    %v1347 = vld [vmem:[%s4 + $0x30] sm:$0xf]
    %v1348 = vld [vmem:[%s4 + $0x34] sm:$0xf]
    %v1349 = vld [vmem:[%s4 + $0x38] sm:$0xf]
    %v1350 = vld [vmem:[%s4 + $0x3c] sm:$0xf]
    %v1351 = vld [vmem:[%s4 + $0x40] sm:$0xf]
    %v1352 = vld [vmem:[%s4 + $0x44] sm:$0xf]
    %v1353 = vld [vmem:[%s4 + $0x48] sm:$0xf]
    %v1354 = vld [vmem:[%s4 + $0x4c] sm:$0xf]
    %v1355 = vld [vmem:[%s4 + $0x50] sm:$0xf]
    %v1356 = vld [vmem:[%s4 + $0x54] sm:$0xf]
    %v1357 = vld [vmem:[%s4 + $0x58] sm:$0xf]
    %v1358 = vld [vmem:[%s4 + $0x5c] sm:$0xf]
    %v1359 = vld [vmem:[%s4 + $0x60] sm:$0xf]
    %v1360 = vld [vmem:[%s4 + $0x64] sm:$0xf]
    %v1361 = vld [vmem:[%s4 + $0x68] sm:$0xf]
    %v1362 = vld [vmem:[%s4 + $0x6c] sm:$0xf]
    %v1363 = vld [vmem:[%s4 + $0x70] sm:$0xf]
    %v1364 = vld [vmem:[%s4 + $0x74] sm:$0xf]
    %v1365 = vld [vmem:[%s4 + $0x78] sm:$0xf]
    %v1366 = vld [vmem:[%s4 + $0x7c] sm:$0xf]
    %v1399 = vunpack.c.l.b16 %v1335
    %v1400 = vunpack.c.l.b16 %v1336
    %v1401 = vunpack.c.l.b16 %v1337
    %v1402 = vunpack.c.l.b16 %v1338
    %v1403 = vunpack.c.l.b16 %v1339
    %v1404 = vunpack.c.l.b16 %v1340
    %v1405 = vunpack.c.l.b16 %v1341
    %v1406 = vunpack.c.l.b16 %v1342
    %v1407 = vunpack.c.l.b16 %v1343
    %v1408 = vunpack.c.l.b16 %v1344
    %v1409 = vunpack.c.l.b16 %v1345
    %v1410 = vunpack.c.l.b16 %v1346
    %v1411 = vunpack.c.l.b16 %v1347
    %v1412 = vunpack.c.l.b16 %v1348
    %v1413 = vunpack.c.l.b16 %v1349
    %v1414 = vunpack.c.l.b16 %v1350
    %v1415 = vunpack.c.l.b16 %v1351
    %v1416 = vunpack.c.l.b16 %v1352
    %v1417 = vunpack.c.l.b16 %v1353
    %v1418 = vunpack.c.l.b16 %v1354
    %v1419 = vunpack.c.l.b16 %v1355
    %v1420 = vunpack.c.l.b16 %v1356
    %v1421 = vunpack.c.l.b16 %v1357
    %v1422 = vunpack.c.l.b16 %v1358
    %v1423 = vunpack.c.l.b16 %v1359
    %v1424 = vunpack.c.l.b16 %v1360
    %v1425 = vunpack.c.l.b16 %v1361
    %v1426 = vunpack.c.l.b16 %v1362
    %v1427 = vunpack.c.l.b16 %v1363
    %v1428 = vunpack.c.l.b16 %v1364
    %v1429 = vunpack.c.l.b16 %v1365
    %v1430 = vunpack.c.l.b16 %v1366
    %v1431 = vpack.c.b16 %v1400, %v1399
    %v1432 = vpack.c.b16 %v1402, %v1401
    %v1433 = vpack.c.b16 %v1404, %v1403
    %v1434 = vpack.c.b16 %v1406, %v1405
    %v1435 = vpack.c.b16 %v1408, %v1407
    %v1436 = vpack.c.b16 %v1410, %v1409
    %v1437 = vpack.c.b16 %v1412, %v1411
    %v1438 = vpack.c.b16 %v1414, %v1413
    %v1439 = vpack.c.b16 %v1416, %v1415
    %v1440 = vpack.c.b16 %v1418, %v1417
    %v1441 = vpack.c.b16 %v1420, %v1419
    %v1442 = vpack.c.b16 %v1422, %v1421
    %v1443 = vpack.c.b16 %v1424, %v1423
    %v1444 = vpack.c.b16 %v1426, %v1425
    %v1445 = vpack.c.b16 %v1428, %v1427
    %v1446 = vpack.c.b16 %v1430, %v1429
    %1463 = vmatprep.subr.bf16.mxu0 0
    %1464 = vmatpush1.bf16.msra.mxu0 %v1431
    %1465 = vmatprep.subr.bf16.mxu0 0
    %1466 = vmatpush1.bf16.msra.mxu0 %v1432
    %1467 = vmatprep.subr.bf16.mxu0 0
    %1468 = vmatpush1.bf16.msra.mxu0 %v1433
    %1469 = vmatprep.subr.bf16.mxu0 0
    %1470 = vmatpush1.bf16.msra.mxu0 %v1434
    %1471 = vmatprep.subr.bf16.mxu0 0
    %1472 = vmatpush1.bf16.msra.mxu0 %v1435
    %1473 = vmatprep.subr.bf16.mxu0 0
    %1474 = vmatpush1.bf16.msra.mxu0 %v1436
    %1475 = vmatprep.subr.bf16.mxu0 0
    %1476 = vmatpush1.bf16.msra.mxu0 %v1437
    %1477 = vmatprep.subr.bf16.mxu0 0
    %1478 = vmatpush1.bf16.msra.mxu0 %v1438
    %1479 = vmatprep.subr.bf16.mxu0 0
    %1480 = vmatpush1.bf16.msra.mxu0 %v1439
    %1481 = vmatprep.subr.bf16.mxu0 0
    %1482 = vmatpush1.bf16.msra.mxu0 %v1440
    %1483 = vmatprep.subr.bf16.mxu0 0
    %1484 = vmatpush1.bf16.msra.mxu0 %v1441
    %1485 = vmatprep.subr.bf16.mxu0 0
    %1486 = vmatpush1.bf16.msra.mxu0 %v1442
    %1487 = vmatprep.subr.bf16.mxu0 0
    %1488 = vmatpush1.bf16.msra.mxu0 %v1443
    %1489 = vmatprep.subr.bf16.mxu0 0
    %1490 = vmatpush1.bf16.msra.mxu0 %v1444
    %1491 = vmatprep.subr.bf16.mxu0 0
    %1492 = vmatpush1.bf16.msra.mxu0 %v1445
    %1493 = vmatprep.subr.bf16.mxu0 0
    %1494 = vmatpush1.bf16.msra.mxu0 %v1446
    %1495 = vmatprep.mubr.bf16.mxu0 %v1334
    %1496 = vmatmul.mubr.bf16.gmra.mrb[0].mxu0 %v1333
    %v1497 = vpop.f32.mrb[0].mxu0
    %v1498 = vadd.f32 0.0, %v1497
    %v1499 = vpop.f32.mrb[0].mxu0
    %v1500 = vpop.f32.mrb[0].mxu0
    %v1501 = vadd.f32 0.0, %v1500
    %v1502 = vpop.f32.mrb[0].mxu0
    %1503 = vdwg.mxu0
    %v1504 = vlaneseq
    %v1505 = vshrl.u32 %v1504, 7
    %v1506 = vsub.s32 2, %v1505
    %v1507 = vrot.slane %v53, %v1506
    %v1508 = vadd.f32 %v1498, %v1507
    %v1509 = vadd.f32 %v1501, %v1507
    %1512 = vrot.lane.b32.xlu0 %v1498, 125
    %v1513 = vpop.permute.xlu0 %1512
    %1514 = vrot.lane.b32.xlu0 %v1501, 125
    %v1515 = vpop.permute.xlu0 %1514
    %v1518 = vmul.f32 %v1508, %v1513
    %v1519 = vmul.f32 %v1509, %v1515
    %1521 = vrot.lane.b32.xlu0 %v1507, 3
    %v1522 = vpop.permute.xlu0 %1521
    %v1524 = vadd.f32 %v1498, %v1522
    %v1525 = vadd.f32 %v1501, %v1522
    %v1526 = vmul.f32 %v1524, %v1513
    %v1527 = vmul.f32 %v1525, %v1515
    %1530 = vrot.lane.b32.xlu0 %v1526, 122
    %v1531 = vpop.permute.xlu0 %1530
    %1532 = vrot.lane.b32.xlu0 %v1527, 122
    %v1533 = vpop.permute.xlu0 %1532
    %v1536 = vadd.f32 %v1518, %v1531
    %v1537 = vadd.f32 %v1519, %v1533
    %1538 = vrot.lane.b32.xlu0 %v1507, 122
    %v1539 = vpop.permute.xlu0 %1538
    %v1541 = vadd.f32 %v1536, %v1539
    %v1542 = vadd.f32 %v1537, %v1539
    %v1543 = vlaneseq
    %v1544 = vand.u32 %v1543, 127
    %vm1545 = vcmp.eq.s32.totalorder %v1544, 0
    %vm1546 = vcmp.eq.s32.totalorder %v1544, 1
    %vm1547 = vcmp.eq.s32.totalorder %v1544, 2
    %1549 = vset.pattern.permute.xlu0 2
    %1550 = vperm.xlu0 %1549, %v1541
    %v1551 = vpop.permute.xlu0 %1550
    %1554 = vset.pattern.permute.xlu0 2
    %1555 = vperm.xlu0 %1554, %v1542
    %v1556 = vpop.permute.xlu0 %1555
    %v1558 = vsel %vm1547, %v1551, 0.0
    %v1559 = vsel %vm1547, %v1556, 0.0
    %1560 = vset.pattern.permute.xlu0 1
    %1561 = vperm.xlu0 %1560, %v1541
    %v1562 = vpop.permute.xlu0 %1561
    %1564 = vset.pattern.permute.xlu0 1
    %1565 = vperm.xlu0 %1564, %v1542
    %v1566 = vpop.permute.xlu0 %1565
    %v1568 = vsel %vm1546, %v1562, %v1558
    %v1569 = vsel %vm1546, %v1566, %v1559
    %1570 = vset.pattern.permute.xlu0 0
    %1571 = vperm.xlu0 %1570, %v1541
    %v1572 = vpop.permute.xlu0 %1571
    %1574 = vset.pattern.permute.xlu0 0
    %1575 = vperm.xlu0 %1574, %v1542
    %v1576 = vpop.permute.xlu0 %1575
    %v1578 = vsel %vm1545, %v1572, %v1568
    %v1579 = vsel %vm1545, %v1576, %v1569
    %1580 = vst [vmem:[#allocation7] sm:$0xff] %v1578
    %1581 = vst [vmem:[#allocation7 + $0x8] sm:$0xff] %v1579
    // Predicated region
    $region34: #{tpu_custom_call.1} parent=1 // pred_check
      _
    $region35: #{tpu_custom_call.1} parent=1 // pred_check_branch
      %1583 = sbr.rel (0) target = $region37
    $region36: #{tpu_custom_call.1} parent=1 // pred_region
      %s1585 = ssub.s32 256, 256
      %1586 = vsyncadd [#allocation4], %s1585
      %s1587 = sshll.u32 [#allocation7], 4
      %s1588 = int_to_ptr.vmem [resolvable:$true] %s1587
      %1593 = dma.vmem_to_hbm [thread:$0]  %s1588, 256, %s6, [#allocation4], 128, 128, 8
    $region37: #{tpu_custom_call.1} parent=1 // pred_fallthru
      _
    // Predicated region
    $region38: #{tpu_custom_call.1} parent=1 // pred_check
      _
    $region39: #{tpu_custom_call.1} parent=1 // pred_check_branch
      %1595 = sbr.rel (0) target = $region41
    $region40: #{tpu_custom_call.1} parent=1 // pred_region
      %1596 = dma.done [#allocation4], 256
    $region41: #{tpu_custom_call.1} parent=1 // pred_fallthru
      _
    %1597 = vsyncpa [#allocation3], 1
    %1598 = vsyncpa [#allocation6], 1
    %1599 = vsyncpa [#allocation4], 1

</llo_original>
